<compile_context>
chip_gen: v5e
topology: v5e:2x2
jax: 0.10.0
libtpu: 0.0.40
codegen_flags: <defaults>
</compile_context>

<pallas_src>
import jax
import jax.numpy as jnp
from jax.experimental import pallas as pl
from jax.experimental.pallas import tpu as pltpu

# ---- small, module-consistent sizes (real RPN uses 1280/256 channels) -------
B = 2
IMG_C, IMG_HW = 3, 28
XPAD_C = 8                   # 3 input channels zero-padded to 8 (aligned MXU K)
FEAT_HW = 7                  # MobileNetV2 stride-32 map (224 -> 7x7)
H_PAD, W_PAD = 10, 16        # 7 + 2 conv halo; W padded to 16 for 8-sublane tiles
IN_DIM = 128                 # stand-in for 1280
HIDDEN = 128                 # stand-in for 256
NUM_ANCHORS = 9
OUT_C = 6 * NUM_ANCHORS      # 54
OUT_PAD = 128                # lane-dense padded output channels (sliced to 54)
M_IN = B * H_PAD * W_PAD     # 320 projection rows (multiple of 8)
M_OUT = B * 8 * 8            # 128 conv-output rows (full MXU tile)
K_COL = 9 * IN_DIM           # 1152 im2col contraction depth
NUM_POS = 16
NUM_NEG = 16
W_CONF, W_REG = 1.0, 5.0
LEAKY_SLOPE = 0.01           # nn.LeakyReLU default


# ===================== single fused Pallas kernel (hot path) =================
def _rpn_fused_kernel(x_ref, wf_ref, bf_ref, w1c_ref, b1_ref, w2_ref, b2_ref,
                      o_ref, feat_ref, xcol_ref):
    # (1) stand-in backbone head: (3->8 padded) -> IN_DIM projection + ReLU.
    #     Halo mask is synthesized in-kernel (no mask DMA); feature map lives
    #     in a VMEM scratch, never touching HBM.
    h = jnp.dot(x_ref[...].astype(jnp.bfloat16), wf_ref[...],
                preferred_element_type=jnp.float32)              # (320, 128) f32
    h = jnp.maximum(h + bf_ref[...], 0.0)
    h4 = h.reshape(B, H_PAD, W_PAD, IN_DIM)
    hh = jax.lax.broadcasted_iota(jnp.int32, (B, H_PAD, W_PAD, IN_DIM), 1)
    ww = jax.lax.broadcasted_iota(jnp.int32, (B, H_PAD, W_PAD, IN_DIM), 2)
    valid = (hh >= 1) & (hh <= FEAT_HW) & (ww >= 1) & (ww <= FEAT_HW)
    feat_ref[...] = jnp.where(valid, h4, 0.0)

    # (2) im2col build: hoist the W (sublane) shift -> only 3 misaligned reads
    #     (one per dw); dh slices are major-axis offsets (free). xcol is bf16.
    for dw in range(3):
        sw = feat_ref[:, :, dw:dw + 8, :]                        # (B, H_PAD, 8, C)
        for dh in range(3):
            t = dh * 3 + dw                                      # matches w1 order
            blk = sw[:, dh:dh + 8, :, :].reshape(M_OUT, IN_DIM)
            xcol_ref[:, t * IN_DIM:(t + 1) * IN_DIM] = blk.astype(jnp.bfloat16)

    # (3) conv3x3(pad=1) as ONE (128,1152)@(1152,128) bf16 matmul; the MXU
    #     accumulates internally over K (no serial acc+VPU-add chain).
    act = jnp.dot(xcol_ref[...], w1c_ref[...], preferred_element_type=jnp.float32)
    act = act + b1_ref[...]
    # TODO(synk): nn.Dropout(p=0.3) omitted (stochastic; eval semantics used).
    act = jnp.where(act > 0.0, act, LEAKY_SLOPE * act)           # LeakyReLU

    # (4) conv1x1 HIDDEN -> OUT_PAD (zero-padded 128-wide, lane-dense store).
    out = jnp.dot(act.astype(jnp.bfloat16), w2_ref[...],
                  preferred_element_type=jnp.float32)
    o_ref[...] = out + b2_ref[...]


def _full_spec(shape):
    return pl.BlockSpec(shape, lambda i: (0,) * len(shape))


def rpn_fused_head(x_rows, params):
    inputs = [x_rows, params["wf"], params["bf"], params["w1c"], params["b1"],
              params["w2p"], params["b2p"]]
    out = pl.pallas_call(
        _rpn_fused_kernel,
        grid=(1,),
        in_specs=[_full_spec(x.shape) for x in inputs],
        out_specs=_full_spec((M_OUT, OUT_PAD)),
        out_shape=jax.ShapeDtypeStruct((M_OUT, OUT_PAD), jnp.float32),
        scratch_shapes=[
            pltpu.VMEM((B, H_PAD, W_PAD, IN_DIM), jnp.float32),  # feature map
            pltpu.VMEM((M_OUT, K_COL), jnp.bfloat16),            # im2col buffer
        ],
        compiler_params=pltpu.CompilerParams(
            dimension_semantics=("arbitrary",)),
    )(*inputs)
    return out                                                    # (128, 128)


# ============================== JAX glue =====================================
def feature_rows(images):
    # TODO(synk): pretrained MobileNetV2 backbone has no clean Pallas equivalent;
    # deterministic stand-in = 4x4 average pool to 7x7 (XLA) + in-kernel 1x1 proj.
    pooled = images.reshape(B, IMG_C, FEAT_HW, 4, FEAT_HW, 4).mean(axis=(3, 5))
    pooled = jnp.transpose(pooled, (0, 2, 3, 1))                 # (B,7,7,3) NHWC
    x_sp = jnp.zeros((B, H_PAD, W_PAD, XPAD_C), jnp.float32)
    x_sp = x_sp.at[:, 1:1 + FEAT_HW, 1:1 + FEAT_HW, :IMG_C].set(pooled)
    return x_sp.reshape(M_IN, XPAD_C)


def generate_grid(batch_size, h=FEAT_HW, w=FEAT_HW):
    xs = jnp.arange(w, dtype=jnp.float32) + 0.5
    ys = jnp.arange(h, dtype=jnp.float32) + 0.5
    gx, gy = jnp.meshgrid(xs, ys, indexing="xy")
    grid = jnp.stack([gx, gy], axis=-1)                          # (h, w, 2) centers
    return jnp.broadcast_to(grid, (batch_size, h, w, 2))


def generate_anchor(anc_shapes, grid):
    centers = grid[:, None]                                      # (B,1,H,W,2)
    wh = anc_shapes[None, :, None, None, :]                      # (1,A,1,1,2)
    return jnp.concatenate([centers - wh / 2.0, centers + wh / 2.0], -1)  # (B,A,H,W,4)


def iou(anc, bboxes):
    Bn, A, H, W, _ = anc.shape
    a = anc.reshape(Bn, A * H * W, 4)[:, :, None, :]
    b = bboxes[:, None, :, :4]
    x1 = jnp.maximum(a[..., 0], b[..., 0]); y1 = jnp.maximum(a[..., 1], b[..., 1])
    x2 = jnp.minimum(a[..., 2], b[..., 2]); y2 = jnp.minimum(a[..., 3], b[..., 3])
    inter = jnp.clip(x2 - x1, 0.0) * jnp.clip(y2 - y1, 0.0)
    area_a = (a[..., 2] - a[..., 0]) * (a[..., 3] - a[..., 1])
    area_b = (b[..., 2] - b[..., 0]) * (b[..., 3] - b[..., 1])
    return inter / (area_a + area_b - inter + 1e-8)              # (B, A*H*W, N)


def reference_on_activated_anchors(anc, bboxes, iou_mat):
    # TODO(synk): simplified deterministic matcher (top-K IoU = positive,
    # bottom-K = negative over the batch-flattened anchor set).
    Bn, A, H, W, _ = anc.shape
    M = A * H * W
    max_iou = iou_mat.max(axis=-1)                               # (B, M)
    gt_idx = iou_mat.argmax(axis=-1)                             # (B, M)
    flat_iou = max_iou.reshape(-1)                               # index space == (B,A,H,W)
    pos_idx = jax.lax.top_k(flat_iou, NUM_POS)[1]
    neg_idx = jax.lax.top_k(-flat_iou, NUM_NEG)[1]
    anc_flat = anc.reshape(Bn * M, 4)
    pos_coord = anc_flat[pos_idx]
    b_of = pos_idx // M
    assigned = bboxes[b_of, gt_idx.reshape(-1)[pos_idx], :4]
    aw = pos_coord[:, 2] - pos_coord[:, 0]; ah = pos_coord[:, 3] - pos_coord[:, 1]
    ax = (pos_coord[:, 0] + pos_coord[:, 2]) / 2; ay = (pos_coord[:, 1] + pos_coord[:, 3]) / 2
    gw = assigned[:, 2] - assigned[:, 0]; gh = assigned[:, 3] - assigned[:, 1]
    gx = (assigned[:, 0] + assigned[:, 2]) / 2; gy = (assigned[:, 1] + assigned[:, 3]) / 2
    gt_offsets = jnp.stack(
        [(gx - ax) / aw, (gy - ay) / ah, jnp.log(gw / aw), jnp.log(gh / ah)], axis=-1)
    return pos_idx, neg_idx, gt_offsets, pos_coord


def generate_proposal(anchors, offsets):
    aw = anchors[..., 2] - anchors[..., 0]; ah = anchors[..., 3] - anchors[..., 1]
    ax = (anchors[..., 0] + anchors[..., 2]) / 2; ay = (anchors[..., 1] + anchors[..., 3]) / 2
    px = ax + offsets[..., 0] * aw; py = ay + offsets[..., 1] * ah
    pw = aw * jnp.exp(offsets[..., 2]); ph = ah * jnp.exp(offsets[..., 3])
    return jnp.stack([px - pw / 2, py - ph / 2, px + pw / 2, py + ph / 2], axis=-1)


def conf_score_regression(conf_scores, batch_size):
    # binary_cross_entropy_with_logits(reduction='sum') / batch_size (plain jnp:
    # 32x2 input; a pallas_call launch would dwarf the VPU work).
    Mh = conf_scores.shape[0] // 2
    gt = jnp.zeros_like(conf_scores)
    gt = gt.at[:Mh, 0].set(1.0).at[Mh:, 1].set(1.0)
    x = conf_scores
    loss = jnp.maximum(x, 0.0) - x * gt + jnp.log1p(jnp.exp(-jnp.abs(x)))
    return jnp.sum(loss) / batch_size


def bbox_regression(offsets, gt_offsets, batch_size):
    # smooth_l1_loss(reduction='sum', beta=1) / batch_size (plain jnp: 16x4).
    d = offsets - gt_offsets
    ad = jnp.abs(d)
    loss = jnp.where(ad < 1.0, 0.5 * d * d, ad - 0.5)
    return jnp.sum(loss) / batch_size


def rpn_forward(images, bboxes, params, output_mode="loss"):
    batch_size = images.shape[0]
    x_rows = feature_rows(images)
    grid_list = generate_grid(batch_size)
    anc_list = generate_anchor(params["anchor_list"], grid_list)
    iou_mat = iou(anc_list, bboxes)
    pos_idx, neg_idx, gt_offsets, pos_coord = reference_on_activated_anchors(
        anc_list, bboxes, iou_mat)

    out = rpn_fused_head(x_rows, params)                         # (128, 128)
    preds = out.reshape(B, 8, 8, OUT_PAD)[:, :FEAT_HW, :FEAT_HW, :OUT_C]   # NHWC
    preds = preds.reshape(B, FEAT_HW, FEAT_HW, NUM_ANCHORS, 6)
    preds = jnp.transpose(preds, (0, 3, 1, 2, 4))                # (B, A, H, W, 6)
    conf_flat = preds[..., :2].reshape(-1, 2)                    # flat order (b,a,h,w)
    off_flat = preds[..., 2:].reshape(-1, 4)

    anchor_idx = jnp.concatenate([pos_idx, neg_idx], axis=0)
    conf_scores = conf_flat[anchor_idx]                          # (2*NUM_POS, 2)
    offsets = off_flat[pos_idx]                                  # (NUM_POS, 4)
    proposals = generate_proposal(pos_coord, offsets)            # (NUM_POS, 4)

    conf_loss = conf_score_regression(conf_scores, batch_size)
    reg_loss = bbox_regression(offsets, gt_offsets, batch_size)
    total_loss = W_CONF * conf_loss + W_REG * reg_loss
    if output_mode == "loss":
        return total_loss
    return total_loss, conf_scores, proposals, pos_idx


def init_params(key):
    # All padding / reshaping / bf16 casting of MXU operands is done ONCE here
    # (layout-stable kernel inputs; no per-step pad).  Padded lanes/rows are
    # exact zeros built fresh from the narrow master weights.
    k = jax.random.split(key, 3)
    s = 0.02
    wf = jax.random.normal(k[0], (IMG_C, IN_DIM), jnp.float32) * s
    wf_pad = jnp.zeros((XPAD_C, IN_DIM), jnp.float32).at[:IMG_C].set(wf)
    w1 = jax.random.normal(k[1], (9, IN_DIM, HIDDEN), jnp.float32) * s
    w2 = jax.random.normal(k[2], (HIDDEN, OUT_C), jnp.float32) * s
    w2_pad = jnp.zeros((HIDDEN, OUT_PAD), jnp.float32).at[:, :OUT_C].set(w2)
    return {
        "wf": wf_pad.astype(jnp.bfloat16),                        # (8, 128)
        "bf": jnp.zeros((1, IN_DIM), jnp.float32),
        "w1c": w1.reshape(K_COL, HIDDEN).astype(jnp.bfloat16),    # (1152, 128), t=dh*3+dw
        "b1": jnp.zeros((1, HIDDEN), jnp.float32),
        "w2p": w2_pad.astype(jnp.bfloat16),                       # (128, 128)
        "b2p": jnp.zeros((1, OUT_PAD), jnp.float32),
        "anchor_list": jnp.array(
            [[1, 1], [2, 2], [3, 3], [4, 4], [5, 5], [2, 3], [3, 2], [3, 5], [5, 3]],
            jnp.float32),
    }


if __name__ == "__main__":
    key = jax.random.PRNGKey(0)
    kimg, kparams = jax.random.split(key)
    params = init_params(kparams)
    images = jax.random.normal(kimg, (B, IMG_C, IMG_HW, IMG_HW), jnp.float32)
    # (B, N, 5) GT boxes: (x_tl, y_tl, x_br, y_br, class) in 7x7 feature coords
    bboxes = jnp.array(
        [[[1.0, 1.0, 3.0, 3.0, 0.0], [4.0, 2.0, 6.0, 5.0, 1.0]],
         [[0.5, 3.0, 2.5, 6.0, 2.0], [3.0, 0.5, 6.5, 3.5, 1.0]]],
        dtype=jnp.float32)

    total_loss = jax.jit(lambda im, bb: rpn_forward(im, bb, params))(images, bboxes)
    total_loss = jax.block_until_ready(total_loss)
    assert total_loss.shape == () and bool(jnp.isfinite(total_loss))
    print("KERNEL_OK")
</pallas_src>

<mosaic_0001>
module attributes {stable_mosaic.version = 11 : i64} {
  func.func @_rpn_fused_kernel(%arg0: i32, %arg1: memref<320x8xf32, #tpu.memory_space<vmem>>, %arg2: memref<8x128xbf16, #tpu.memory_space<vmem>>, %arg3: memref<1x128xf32, #tpu.memory_space<vmem>>, %arg4: memref<1152x128xbf16, #tpu.memory_space<vmem>>, %arg5: memref<1x128xf32, #tpu.memory_space<vmem>>, %arg6: memref<128x128xbf16, #tpu.memory_space<vmem>>, %arg7: memref<1x128xf32, #tpu.memory_space<vmem>>, %arg8: memref<128x128xf32, #tpu.memory_space<vmem>>, %arg9: memref<2x10x16x128xf32, #tpu.memory_space<vmem>>, %arg10: memref<128x1152xbf16, #tpu.memory_space<vmem>>) attributes {dimension_semantics = [#tpu.dimension_semantics<arbitrary>], iteration_bounds = array<i64: 1>, scalar_prefetch = 0 : i64, scratch_operands = 2 : i64, tpu.core_type = #tpu.core_type<tc>, window_params = [{pipeline_mode = #tpu.pipeline_mode<synchronous>, transform_indices = @transform_0, window_bounds = array<i64: 320, 8>}, {pipeline_mode = #tpu.pipeline_mode<synchronous>, transform_indices = @transform_1, window_bounds = array<i64: 8, 128>}, {pipeline_mode = #tpu.pipeline_mode<synchronous>, transform_indices = @transform_2, window_bounds = array<i64: 1, 128>}, {pipeline_mode = #tpu.pipeline_mode<synchronous>, transform_indices = @transform_3, window_bounds = array<i64: 1152, 128>}, {pipeline_mode = #tpu.pipeline_mode<synchronous>, transform_indices = @transform_4, window_bounds = array<i64: 1, 128>}, {pipeline_mode = #tpu.pipeline_mode<synchronous>, transform_indices = @transform_5, window_bounds = array<i64: 128, 128>}, {pipeline_mode = #tpu.pipeline_mode<synchronous>, transform_indices = @transform_6, window_bounds = array<i64: 1, 128>}, {pipeline_mode = #tpu.pipeline_mode<synchronous>, transform_indices = @transform_7, window_bounds = array<i64: 128, 128>}]} {
    %c0 = arith.constant 0 : index
    %c0_0 = arith.constant 0 : index
    %0 = vector.load %arg1[%c0, %c0_0] : memref<320x8xf32, #tpu.memory_space<vmem>>, vector<320x8xf32>
    %1 = arith.truncf %0 : vector<320x8xf32> to vector<320x8xbf16>
    %c0_1 = arith.constant 0 : index
    %c0_2 = arith.constant 0 : index
    %2 = vector.load %arg2[%c0_1, %c0_2] : memref<8x128xbf16, #tpu.memory_space<vmem>>, vector<8x128xbf16>
    %cst = arith.constant dense<0.000000e+00> : vector<320x128xf32>
    %3 = tpu.matmul %1, %2, %cst {dimension_numbers = #tpu.dot_dimension_numbers<[1], [0], [0], [1], [0, 0, 1, 1], [], []>} : vector<320x8xbf16>, vector<8x128xbf16>, vector<320x128xf32> -> vector<320x128xf32>
    %c0_3 = arith.constant 0 : index
    %c0_4 = arith.constant 0 : index
    %4 = vector.load %arg3[%c0_3, %c0_4] : memref<1x128xf32, #tpu.memory_space<vmem>>, vector<1x128xf32>
    %5 = vector.broadcast %4 : vector<1x128xf32> to vector<320x128xf32>
    %6 = arith.addf %3, %5 : vector<320x128xf32>
    %cst_5 = arith.constant 0.000000e+00 : f32
    %7 = vector.broadcast %cst_5 : f32 to vector<320x128xf32>
    %8 = arith.maximumf %6, %7 : vector<320x128xf32>
    %9 = vector.shape_cast %8 : vector<320x128xf32> to vector<2x10x16x128xf32>
    %10 = tpu.iota {dimensions = array<i32: 1>} : vector<2x10x16x128xi32>
    %11 = tpu.iota {dimensions = array<i32: 2>} : vector<2x10x16x128xi32>
    %c1_i32 = arith.constant 1 : i32
    %12 = vector.broadcast %c1_i32 : i32 to vector<2x10x16x128xi32>
    %13 = arith.cmpi sge, %10, %12 : vector<2x10x16x128xi32>
    %c7_i32 = arith.constant 7 : i32
    %14 = vector.broadcast %c7_i32 : i32 to vector<2x10x16x128xi32>
    %15 = arith.cmpi sle, %10, %14 : vector<2x10x16x128xi32>
    %16 = arith.andi %13, %15 : vector<2x10x16x128xi1>
    %c1_i32_6 = arith.constant 1 : i32
    %17 = vector.broadcast %c1_i32_6 : i32 to vector<2x10x16x128xi32>
    %18 = arith.cmpi sge, %11, %17 : vector<2x10x16x128xi32>
    %19 = arith.andi %16, %18 : vector<2x10x16x128xi1>
    %c7_i32_7 = arith.constant 7 : i32
    %20 = vector.broadcast %c7_i32_7 : i32 to vector<2x10x16x128xi32>
    %21 = arith.cmpi sle, %11, %20 : vector<2x10x16x128xi32>
    %22 = arith.andi %19, %21 : vector<2x10x16x128xi1>
    %cst_8 = arith.constant 0.000000e+00 : f32
    %23 = vector.broadcast %cst_8 : f32 to vector<2x10x16x128xf32>
    %24 = arith.select %22, %9, %23 : vector<2x10x16x128xi1>, vector<2x10x16x128xf32>
    %c0_9 = arith.constant 0 : index
    %c0_10 = arith.constant 0 : index
    %c0_11 = arith.constant 0 : index
    %c0_12 = arith.constant 0 : index
    %25 = vector.load %arg9[%c0_9, %c0_10, %c0_11, %c0_12] : memref<2x10x16x128xf32, #tpu.memory_space<vmem>>, vector<2x10x16x128xf32>
    tpu.vector_store %arg9[%c0_9, %c0_10, %c0_11, %c0_12], %24 {strides = array<i32>} : memref<2x10x16x128xf32, #tpu.memory_space<vmem>>, vector<2x10x16x128xf32>,
    %c0_13 = arith.constant 0 : index
    %c0_14 = arith.constant 0 : index
    %c0_15 = arith.constant 0 : index
    %c0_16 = arith.constant 0 : index
    %26 = vector.load %arg9[%c0_13, %c0_14, %c0_15, %c0_16] : memref<2x10x16x128xf32, #tpu.memory_space<vmem>>, vector<2x10x8x128xf32>
    %27 = vector.extract_strided_slice %26 {offsets = [0, 0, 0, 0], sizes = [2, 8, 8, 128], strides = [1, 1, 1, 1]} : vector<2x10x8x128xf32> to vector<2x8x8x128xf32>
    %28 = vector.shape_cast %27 : vector<2x8x8x128xf32> to vector<128x128xf32>
    %29 = arith.truncf %28 : vector<128x128xf32> to vector<128x128xbf16>
    %c0_17 = arith.constant 0 : index
    %c0_18 = arith.constant 0 : index
    %30 = vector.load %arg10[%c0_17, %c0_18] : memref<128x1152xbf16, #tpu.memory_space<vmem>>, vector<128x128xbf16>
    tpu.vector_store %arg10[%c0_17, %c0_18], %29 {strides = array<i32>} : memref<128x1152xbf16, #tpu.memory_space<vmem>>, vector<128x128xbf16>,
    %31 = vector.extract_strided_slice %26 {offsets = [0, 1, 0, 0], sizes = [2, 8, 8, 128], strides = [1, 1, 1, 1]} : vector<2x10x8x128xf32> to vector<2x8x8x128xf32>
    %32 = vector.shape_cast %31 : vector<2x8x8x128xf32> to vector<128x128xf32>
    %33 = arith.truncf %32 : vector<128x128xf32> to vector<128x128xbf16>
    %c0_19 = arith.constant 0 : index
    %c384 = arith.constant 384 : index
    %34 = vector.load %arg10[%c0_19, %c384] : memref<128x1152xbf16, #tpu.memory_space<vmem>>, vector<128x128xbf16>
    tpu.vector_store %arg10[%c0_19, %c384], %33 {strides = array<i32>} : memref<128x1152xbf16, #tpu.memory_space<vmem>>, vector<128x128xbf16>,
    %35 = vector.extract_strided_slice %26 {offsets = [0, 2, 0, 0], sizes = [2, 8, 8, 128], strides = [1, 1, 1, 1]} : vector<2x10x8x128xf32> to vector<2x8x8x128xf32>
    %36 = vector.shape_cast %35 : vector<2x8x8x128xf32> to vector<128x128xf32>
    %37 = arith.truncf %36 : vector<128x128xf32> to vector<128x128xbf16>
    %c0_20 = arith.constant 0 : index
    %c768 = arith.constant 768 : index
    %38 = vector.load %arg10[%c0_20, %c768] : memref<128x1152xbf16, #tpu.memory_space<vmem>>, vector<128x128xbf16>
    tpu.vector_store %arg10[%c0_20, %c768], %37 {strides = array<i32>} : memref<128x1152xbf16, #tpu.memory_space<vmem>>, vector<128x128xbf16>,
    %c0_21 = arith.constant 0 : index
    %c0_22 = arith.constant 0 : index
    %c1 = arith.constant 1 : index
    %c0_23 = arith.constant 0 : index
    %39 = vector.load %arg9[%c0_21, %c0_22, %c1, %c0_23] : memref<2x10x16x128xf32, #tpu.memory_space<vmem>>, vector<2x10x8x128xf32>
    %40 = vector.extract_strided_slice %39 {offsets = [0, 0, 0, 0], sizes = [2, 8, 8, 128], strides = [1, 1, 1, 1]} : vector<2x10x8x128xf32> to vector<2x8x8x128xf32>
    %41 = vector.shape_cast %40 : vector<2x8x8x128xf32> to vector<128x128xf32>
    %42 = arith.truncf %41 : vector<128x128xf32> to vector<128x128xbf16>
    %c0_24 = arith.constant 0 : index
    %c128 = arith.constant 128 : index
    %43 = vector.load %arg10[%c0_24, %c128] : memref<128x1152xbf16, #tpu.memory_space<vmem>>, vector<128x128xbf16>
    tpu.vector_store %arg10[%c0_24, %c128], %42 {strides = array<i32>} : memref<128x1152xbf16, #tpu.memory_space<vmem>>, vector<128x128xbf16>,
    %44 = vector.extract_strided_slice %39 {offsets = [0, 1, 0, 0], sizes = [2, 8, 8, 128], strides = [1, 1, 1, 1]} : vector<2x10x8x128xf32> to vector<2x8x8x128xf32>
    %45 = vector.shape_cast %44 : vector<2x8x8x128xf32> to vector<128x128xf32>
    %46 = arith.truncf %45 : vector<128x128xf32> to vector<128x128xbf16>
    %c0_25 = arith.constant 0 : index
    %c512 = arith.constant 512 : index
    %47 = vector.load %arg10[%c0_25, %c512] : memref<128x1152xbf16, #tpu.memory_space<vmem>>, vector<128x128xbf16>
    tpu.vector_store %arg10[%c0_25, %c512], %46 {strides = array<i32>} : memref<128x1152xbf16, #tpu.memory_space<vmem>>, vector<128x128xbf16>,
    %48 = vector.extract_strided_slice %39 {offsets = [0, 2, 0, 0], sizes = [2, 8, 8, 128], strides = [1, 1, 1, 1]} : vector<2x10x8x128xf32> to vector<2x8x8x128xf32>
    %49 = vector.shape_cast %48 : vector<2x8x8x128xf32> to vector<128x128xf32>
    %50 = arith.truncf %49 : vector<128x128xf32> to vector<128x128xbf16>
    %c0_26 = arith.constant 0 : index
    %c896 = arith.constant 896 : index
    %51 = vector.load %arg10[%c0_26, %c896] : memref<128x1152xbf16, #tpu.memory_space<vmem>>, vector<128x128xbf16>
    tpu.vector_store %arg10[%c0_26, %c896], %50 {strides = array<i32>} : memref<128x1152xbf16, #tpu.memory_space<vmem>>, vector<128x128xbf16>,
    %c0_27 = arith.constant 0 : index
    %c0_28 = arith.constant 0 : index
    %c2 = arith.constant 2 : index
    %c0_29 = arith.constant 0 : index
    %52 = vector.load %arg9[%c0_27, %c0_28, %c2, %c0_29] : memref<2x10x16x128xf32, #tpu.memory_space<vmem>>, vector<2x10x8x128xf32>
    %53 = vector.extract_strided_slice %52 {offsets = [0, 0, 0, 0], sizes = [2, 8, 8, 128], strides = [1, 1, 1, 1]} : vector<2x10x8x128xf32> to vector<2x8x8x128xf32>
    %54 = vector.shape_cast %53 : vector<2x8x8x128xf32> to vector<128x128xf32>
    %55 = arith.truncf %54 : vector<128x128xf32> to vector<128x128xbf16>
    %c0_30 = arith.constant 0 : index
    %c256 = arith.constant 256 : index
    %56 = vector.load %arg10[%c0_30, %c256] : memref<128x1152xbf16, #tpu.memory_space<vmem>>, vector<128x128xbf16>
    tpu.vector_store %arg10[%c0_30, %c256], %55 {strides = array<i32>} : memref<128x1152xbf16, #tpu.memory_space<vmem>>, vector<128x128xbf16>,
    %57 = vector.extract_strided_slice %52 {offsets = [0, 1, 0, 0], sizes = [2, 8, 8, 128], strides = [1, 1, 1, 1]} : vector<2x10x8x128xf32> to vector<2x8x8x128xf32>
    %58 = vector.shape_cast %57 : vector<2x8x8x128xf32> to vector<128x128xf32>
    %59 = arith.truncf %58 : vector<128x128xf32> to vector<128x128xbf16>
    %c0_31 = arith.constant 0 : index
    %c640 = arith.constant 640 : index
    %60 = vector.load %arg10[%c0_31, %c640] : memref<128x1152xbf16, #tpu.memory_space<vmem>>, vector<128x128xbf16>
    tpu.vector_store %arg10[%c0_31, %c640], %59 {strides = array<i32>} : memref<128x1152xbf16, #tpu.memory_space<vmem>>, vector<128x128xbf16>,
    %61 = vector.extract_strided_slice %52 {offsets = [0, 2, 0, 0], sizes = [2, 8, 8, 128], strides = [1, 1, 1, 1]} : vector<2x10x8x128xf32> to vector<2x8x8x128xf32>
    %62 = vector.shape_cast %61 : vector<2x8x8x128xf32> to vector<128x128xf32>
    %63 = arith.truncf %62 : vector<128x128xf32> to vector<128x128xbf16>
    %c0_32 = arith.constant 0 : index
    %c1024 = arith.constant 1024 : index
    %64 = vector.load %arg10[%c0_32, %c1024] : memref<128x1152xbf16, #tpu.memory_space<vmem>>, vector<128x128xbf16>
    tpu.vector_store %arg10[%c0_32, %c1024], %63 {strides = array<i32>} : memref<128x1152xbf16, #tpu.memory_space<vmem>>, vector<128x128xbf16>,
    %c0_33 = arith.constant 0 : index
    %c0_34 = arith.constant 0 : index
    %65 = vector.load %arg10[%c0_33, %c0_34] : memref<128x1152xbf16, #tpu.memory_space<vmem>>, vector<128x1152xbf16>
    %c0_35 = arith.constant 0 : index
    %c0_36 = arith.constant 0 : index
    %66 = vector.load %arg4[%c0_35, %c0_36] : memref<1152x128xbf16, #tpu.memory_space<vmem>>, vector<1152x128xbf16>
    %cst_37 = arith.constant dense<0.000000e+00> : vector<128x128xf32>
    %67 = tpu.matmul %65, %66, %cst_37 {dimension_numbers = #tpu.dot_dimension_numbers<[1], [0], [0], [1], [0, 0, 1, 1], [], []>} : vector<128x1152xbf16>, vector<1152x128xbf16>, vector<128x128xf32> -> vector<128x128xf32>
    %c0_38 = arith.constant 0 : index
    %c0_39 = arith.constant 0 : index
    %68 = vector.load %arg5[%c0_38, %c0_39] : memref<1x128xf32, #tpu.memory_space<vmem>>, vector<1x128xf32>
    %69 = vector.broadcast %68 : vector<1x128xf32> to vector<128x128xf32>
    %70 = arith.addf %67, %69 : vector<128x128xf32>
    %cst_40 = arith.constant 0.000000e+00 : f32
    %71 = vector.broadcast %cst_40 : f32 to vector<128x128xf32>
    %72 = arith.cmpf ogt, %70, %71 : vector<128x128xf32>
    %cst_41 = arith.constant 0.00999999977 : f32
    %73 = vector.broadcast %cst_41 : f32 to vector<128x128xf32>
    %74 = arith.mulf %73, %70 : vector<128x128xf32>
    %75 = arith.select %72, %70, %74 : vector<128x128xi1>, vector<128x128xf32>
    %76 = arith.truncf %75 : vector<128x128xf32> to vector<128x128xbf16>
    %c0_42 = arith.constant 0 : index
    %c0_43 = arith.constant 0 : index
    %77 = vector.load %arg6[%c0_42, %c0_43] : memref<128x128xbf16, #tpu.memory_space<vmem>>, vector<128x128xbf16>
    %cst_44 = arith.constant dense<0.000000e+00> : vector<128x128xf32>
    %78 = tpu.matmul %76, %77, %cst_44 {dimension_numbers = #tpu.dot_dimension_numbers<[1], [0], [0], [1], [0, 0, 1, 1], [], []>} : vector<128x128xbf16>, vector<128x128xbf16>, vector<128x128xf32> -> vector<128x128xf32>
    %c0_45 = arith.constant 0 : index
    %c0_46 = arith.constant 0 : index
    %79 = vector.load %arg7[%c0_45, %c0_46] : memref<1x128xf32, #tpu.memory_space<vmem>>, vector<1x128xf32>
    %80 = vector.broadcast %79 : vector<1x128xf32> to vector<128x128xf32>
    %81 = arith.addf %78, %80 : vector<128x128xf32>
    %c0_47 = arith.constant 0 : index
    %c0_48 = arith.constant 0 : index
    %82 = vector.load %arg8[%c0_47, %c0_48] : memref<128x128xf32, #tpu.memory_space<vmem>>, vector<128x128xf32>
    tpu.vector_store %arg8[%c0_47, %c0_48], %81 {strides = array<i32>} : memref<128x128xf32, #tpu.memory_space<vmem>>, vector<128x128xf32>,
    return
  }
  func.func @transform_0(%arg0: i32) -> (i32, i32) {
    %c0_i32 = arith.constant 0 : i32
    %c0_i32_0 = arith.constant 0 : i32
    %c0_i32_1 = arith.constant 0 : i32
    return %c0_i32, %c0_i32_0 : i32, i32
  }
  func.func @transform_1(%arg0: i32) -> (i32, i32) {
    %c0_i32 = arith.constant 0 : i32
    %c0_i32_0 = arith.constant 0 : i32
    %c0_i32_1 = arith.constant 0 : i32
    return %c0_i32, %c0_i32_0 : i32, i32
  }
  func.func @transform_2(%arg0: i32) -> (i32, i32) {
    %c0_i32 = arith.constant 0 : i32
    %c0_i32_0 = arith.constant 0 : i32
    %c0_i32_1 = arith.constant 0 : i32
    return %c0_i32, %c0_i32_0 : i32, i32
  }
  func.func @transform_3(%arg0: i32) -> (i32, i32) {
    %c0_i32 = arith.constant 0 : i32
    %c0_i32_0 = arith.constant 0 : i32
    %c0_i32_1 = arith.constant 0 : i32
    return %c0_i32, %c0_i32_0 : i32, i32
  }
  func.func @transform_4(%arg0: i32) -> (i32, i32) {
    %c0_i32 = arith.constant 0 : i32
    %c0_i32_0 = arith.constant 0 : i32
    %c0_i32_1 = arith.constant 0 : i32
    return %c0_i32, %c0_i32_0 : i32, i32
  }
  func.func @transform_5(%arg0: i32) -> (i32, i32) {
    %c0_i32 = arith.constant 0 : i32
    %c0_i32_0 = arith.constant 0 : i32
    %c0_i32_1 = arith.constant 0 : i32
    return %c0_i32, %c0_i32_0 : i32, i32
  }
  func.func @transform_6(%arg0: i32) -> (i32, i32) {
    %c0_i32 = arith.constant 0 : i32
    %c0_i32_0 = arith.constant 0 : i32
    %c0_i32_1 = arith.constant 0 : i32
    return %c0_i32, %c0_i32_0 : i32, i32
  }
  func.func @transform_7(%arg0: i32) -> (i32, i32) {
    %c0_i32 = arith.constant 0 : i32
    %c0_i32_0 = arith.constant 0 : i32
    %c0_i32_1 = arith.constant 0 : i32
    return %c0_i32, %c0_i32_0 : i32, i32
  }
}

</mosaic_0001>

<llo_original>
// kernel: neg.2
$region0: #{neg.2}
  #allocation0 [shape = 's32[1]{0}', space=sflag, size = 0x4, scoped, tag = 'scoped memory for neg.2']
  %s0 = inlined_call_operand.vmem [shape: f32[882], index: 0, kind: input, shape index: {}]
  %s1 = inlined_call_operand.vmem [shape: f32[882], index: 1, kind: output, shape index: {}]
  %v2 = vld [vmem:[%s0] sm:$0x7f]
  %3 = xla_tuple %v2
  %4 = xla_tuple %3
  %v5 = vxor.u32 %v2, 2147483648
  %6 = xla_tuple %v5
  %7 = vst [vmem:[%s1] sm:$0xff] %v5

// kernel: _lambda_.1
$region0: #{_lambda_.1}
  #allocation0 [shape = 'u32[]', space=smem, size = 0x4, offset = 0x4, fixed_abs, tag = 'smem constant byte address 0x4 - core index']
  #allocation1 [shape = 'u32[72,128]{1,0:T(1,128)}', space=vmem, size = 0x9000, scoped, tag = 'internal scratch']
  #allocation2 [shape = 'f32[2,10,16,128]{3,2,1,0:T(8,128)}', space=vmem, size = 0x28000, scoped, tag = 'scratch operand']
  #allocation3 [shape = 'bf16[128,1152]{1,0:T(8,128)(2,1)}', space=vmem, size = 0x48000, scoped, tag = 'scratch operand']
  %s0 = inlined_call_operand.vmem [shape: f32[320,8], index: 0, kind: input, shape index: {}]
  %s1 = inlined_call_operand.vmem [shape: bf16[8,128], index: 1, kind: input, shape index: {}]
  %s2 = inlined_call_operand.vmem [shape: f32[1,128], index: 2, kind: input, shape index: {}, may-alias: {2,4,6}]
  %s3 = inlined_call_operand.vmem [shape: bf16[1152,128], index: 3, kind: input, shape index: {}]
  %s4 = inlined_call_operand.vmem [shape: f32[1,128], index: 4, kind: input, shape index: {}, may-alias: {2,4,6}]
  %s5 = inlined_call_operand.vmem [shape: bf16[128,128], index: 5, kind: input, shape index: {}]
  %s6 = inlined_call_operand.vmem [shape: f32[1,128], index: 6, kind: input, shape index: {}, may-alias: {2,4,6}]
  %s7 = inlined_call_operand.vmem [shape: f32[128,128], index: 7, kind: output, shape index: {}]
  %s8 = sld [smem:[#allocation0]]
  $region38: #{_lambda_.1} parent=0
    _
  %s10 = ssub.s32 1, %s8
  %s11 = scalar_select 0, %s10, %s8
  // Predicated region
  $region2: #{_lambda_.1} parent=0 // pred_check
    _
  $region3: #{_lambda_.1} parent=0 // pred_check_branch
    %13 = sbr.rel (0) target = $region5
  $region4: #{_lambda_.1} parent=0 // pred_region
    _
  $region5: #{_lambda_.1} parent=0 // pred_fallthru
    _
  // Predicated region
  $region6: #{_lambda_.1} parent=0 // pred_check
    _
  $region7: #{_lambda_.1} parent=0 // pred_check_branch
    %15 = sbr.rel (0) target = $region9
  $region8: #{_lambda_.1} parent=0 // pred_region
    _
  $region9: #{_lambda_.1} parent=0 // pred_fallthru
    _
  // Predicated region
  $region10: #{_lambda_.1} parent=0 // pred_check
    _
  $region11: #{_lambda_.1} parent=0 // pred_check_branch
    %17 = sbr.rel (0) target = $region13
  $region12: #{_lambda_.1} parent=0 // pred_region
    _
  $region13: #{_lambda_.1} parent=0 // pred_fallthru
    _
  // Predicated region
  $region14: #{_lambda_.1} parent=0 // pred_check
    _
  $region15: #{_lambda_.1} parent=0 // pred_check_branch
    %19 = sbr.rel (0) target = $region17
  $region16: #{_lambda_.1} parent=0 // pred_region
    _
  $region17: #{_lambda_.1} parent=0 // pred_fallthru
    _
  // Predicated region
  $region18: #{_lambda_.1} parent=0 // pred_check
    _
  $region19: #{_lambda_.1} parent=0 // pred_check_branch
    %21 = sbr.rel (0) target = $region21
  $region20: #{_lambda_.1} parent=0 // pred_region
    _
  $region21: #{_lambda_.1} parent=0 // pred_fallthru
    _
  // Predicated region
  $region22: #{_lambda_.1} parent=0 // pred_check
    _
  $region23: #{_lambda_.1} parent=0 // pred_check_branch
    %23 = sbr.rel (0) target = $region25
  $region24: #{_lambda_.1} parent=0 // pred_region
    _
  $region25: #{_lambda_.1} parent=0 // pred_fallthru
    _
  // Predicated region
  $region26: #{_lambda_.1} parent=0 // pred_check
    _
  $region27: #{_lambda_.1} parent=0 // pred_check_branch
    %25 = sbr.rel (0) target = $region29
  $region28: #{_lambda_.1} parent=0 // pred_region
    _
  $region29: #{_lambda_.1} parent=0 // pred_fallthru
    _
  %v27 = vld [vmem:[%s0] sm:$0xff]
  %v28 = vld [vmem:[%s0 + $0x8] sm:$0xff]
  %v29 = vld [vmem:[%s0 + $0x10] sm:$0xff]
  %v30 = vld [vmem:[%s0 + $0x18] sm:$0xff]
  %v31 = vld [vmem:[%s0 + $0x20] sm:$0xff]
  %v32 = vld [vmem:[%s0 + $0x28] sm:$0xff]
  %v33 = vld [vmem:[%s0 + $0x30] sm:$0xff]
  %v34 = vld [vmem:[%s0 + $0x38] sm:$0xff]
  %v35 = vld [vmem:[%s0 + $0x40] sm:$0xff]
  %v36 = vld [vmem:[%s0 + $0x48] sm:$0xff]
  %v37 = vld [vmem:[%s0 + $0x50] sm:$0xff]
  %v38 = vld [vmem:[%s0 + $0x58] sm:$0xff]
  %v39 = vld [vmem:[%s0 + $0x60] sm:$0xff]
  %v40 = vld [vmem:[%s0 + $0x68] sm:$0xff]
  %v41 = vld [vmem:[%s0 + $0x70] sm:$0xff]
  %v42 = vld [vmem:[%s0 + $0x78] sm:$0xff]
  %v43 = vld [vmem:[%s0 + $0x80] sm:$0xff]
  %v44 = vld [vmem:[%s0 + $0x88] sm:$0xff]
  %v45 = vld [vmem:[%s0 + $0x90] sm:$0xff]
  %v46 = vld [vmem:[%s0 + $0x98] sm:$0xff]
  %v47 = vld [vmem:[%s0 + $0xa0] sm:$0xff]
  %v48 = vld [vmem:[%s0 + $0xa8] sm:$0xff]
  %v49 = vld [vmem:[%s0 + $0xb0] sm:$0xff]
  %v50 = vld [vmem:[%s0 + $0xb8] sm:$0xff]
  %v51 = vld [vmem:[%s0 + $0xc0] sm:$0xff]
  %v52 = vld [vmem:[%s0 + $0xc8] sm:$0xff]
  %v53 = vld [vmem:[%s0 + $0xd0] sm:$0xff]
  %v54 = vld [vmem:[%s0 + $0xd8] sm:$0xff]
  %v55 = vld [vmem:[%s0 + $0xe0] sm:$0xff]
  %v56 = vld [vmem:[%s0 + $0xe8] sm:$0xff]
  %v57 = vld [vmem:[%s0 + $0xf0] sm:$0xff]
  %v58 = vld [vmem:[%s0 + $0xf8] sm:$0xff]
  %v59 = vld [vmem:[%s0 + $0x100] sm:$0xff]
  %v60 = vld [vmem:[%s0 + $0x108] sm:$0xff]
  %v61 = vld [vmem:[%s0 + $0x110] sm:$0xff]
  %v62 = vld [vmem:[%s0 + $0x118] sm:$0xff]
  %v63 = vld [vmem:[%s0 + $0x120] sm:$0xff]
  %v64 = vld [vmem:[%s0 + $0x128] sm:$0xff]
  %v65 = vld [vmem:[%s0 + $0x130] sm:$0xff]
  %v66 = vld [vmem:[%s0 + $0x138] sm:$0xff]
  %v67 = vpack.c.bf16 %v28, %v27
  %v68 = vpack.c.bf16 %v30, %v29
  %v69 = vpack.c.bf16 %v32, %v31
  %v70 = vpack.c.bf16 %v34, %v33
  %v71 = vpack.c.bf16 %v36, %v35
  %v72 = vpack.c.bf16 %v38, %v37
  %v73 = vpack.c.bf16 %v40, %v39
  %v74 = vpack.c.bf16 %v42, %v41
  %v75 = vpack.c.bf16 %v44, %v43
  %v76 = vpack.c.bf16 %v46, %v45
  %v77 = vpack.c.bf16 %v48, %v47
  %v78 = vpack.c.bf16 %v50, %v49
  %v79 = vpack.c.bf16 %v52, %v51
  %v80 = vpack.c.bf16 %v54, %v53
  %v81 = vpack.c.bf16 %v56, %v55
  %v82 = vpack.c.bf16 %v58, %v57
  %v83 = vpack.c.bf16 %v60, %v59
  %v84 = vpack.c.bf16 %v62, %v61
  %v85 = vpack.c.bf16 %v64, %v63
  %v86 = vpack.c.bf16 %v66, %v65
  %v87 = vld [vmem:[%s1] sm:$0xf]
  %v88 = vld [vmem:[%s2] sm:$0x1]
  %v90 = vperm.slane %v88, 0
  %vm92 = vcmask 64512
  %v94 = vsel %vm92, %v67, 0
  %v97 = vsel %vm92, %v68, 0
  %v100 = vsel %vm92, %v69, 0
  %v103 = vsel %vm92, %v70, 0
  %v106 = vsel %vm92, %v71, 0
  %v109 = vsel %vm92, %v72, 0
  %v112 = vsel %vm92, %v73, 0
  %v115 = vsel %vm92, %v74, 0
  %v118 = vsel %vm92, %v75, 0
  %v121 = vsel %vm92, %v76, 0
  %v124 = vsel %vm92, %v77, 0
  %v127 = vsel %vm92, %v78, 0
  %v130 = vsel %vm92, %v79, 0
  %v133 = vsel %vm92, %v80, 0
  %v136 = vsel %vm92, %v81, 0
  %v139 = vsel %vm92, %v82, 0
  %v142 = vsel %vm92, %v83, 0
  %v145 = vsel %vm92, %v84, 0
  %v148 = vsel %vm92, %v85, 0
  %v151 = vsel %vm92, %v86, 0
  %vm153 = vcmask 1043456
  %v155 = vsel %vm153, %v87, 0
  %157 = vmatpush.bf16.msra.mxu0 0
  %158 = vmatpush.bf16.msra.mxu0 0
  %159 = vmatpush.bf16.msra.mxu0 0
  %160 = vmatpush.bf16.msra.mxu0 0
  %161 = vmatpush.bf16.msra.mxu0 0
  %162 = vmatpush.bf16.msra.mxu0 0
  %163 = vmatpush.bf16.msra.mxu0 0
  %164 = vmatpush.bf16.msra.mxu0 %v155
  %165 = vmatmul.bf16.gmra.mxu0 %v94
  %v166 = vpop.f32.mrf.mxu0
  %v167 = vadd.f32 %v90, %v166
  %v168 = vpop.f32.mrf.mxu0
  %v169 = vadd.f32 %v90, %v168
  %170 = vmatmul.bf16.gmra.mxu0 %v97
  %v171 = vpop.f32.mrf.mxu0
  %v172 = vadd.f32 %v90, %v171
  %v173 = vpop.f32.mrf.mxu0
  %v174 = vadd.f32 %v90, %v173
  %175 = vmatmul.bf16.gmra.mxu0 %v100
  %v176 = vpop.f32.mrf.mxu0
  %v177 = vadd.f32 %v90, %v176
  %v178 = vpop.f32.mrf.mxu0
  %v179 = vadd.f32 %v90, %v178
  %180 = vmatmul.bf16.gmra.mxu0 %v103
  %v181 = vpop.f32.mrf.mxu0
  %v182 = vadd.f32 %v90, %v181
  %v183 = vpop.f32.mrf.mxu0
  %v184 = vadd.f32 %v90, %v183
  %185 = vmatmul.bf16.gmra.mxu0 %v106
  %v186 = vpop.f32.mrf.mxu0
  %v187 = vadd.f32 %v90, %v186
  %v188 = vpop.f32.mrf.mxu0
  %v189 = vadd.f32 %v90, %v188
  %190 = vmatmul.bf16.gmra.mxu0 %v109
  %v191 = vpop.f32.mrf.mxu0
  %v192 = vadd.f32 %v90, %v191
  %v193 = vpop.f32.mrf.mxu0
  %v194 = vadd.f32 %v90, %v193
  %195 = vmatmul.bf16.gmra.mxu0 %v112
  %v196 = vpop.f32.mrf.mxu0
  %v197 = vadd.f32 %v90, %v196
  %v198 = vpop.f32.mrf.mxu0
  %v199 = vadd.f32 %v90, %v198
  %200 = vmatmul.bf16.gmra.mxu0 %v115
  %v201 = vpop.f32.mrf.mxu0
  %v202 = vadd.f32 %v90, %v201
  %v203 = vpop.f32.mrf.mxu0
  %v204 = vadd.f32 %v90, %v203
  %205 = vmatmul.bf16.gmra.mxu0 %v118
  %v206 = vpop.f32.mrf.mxu0
  %v207 = vadd.f32 %v90, %v206
  %v208 = vpop.f32.mrf.mxu0
  %v209 = vadd.f32 %v90, %v208
  %210 = vmatmul.bf16.gmra.mxu0 %v121
  %v211 = vpop.f32.mrf.mxu0
  %v212 = vadd.f32 %v90, %v211
  %v213 = vpop.f32.mrf.mxu0
  %v214 = vadd.f32 %v90, %v213
  %215 = vmatmul.bf16.gmra.mxu0 %v124
  %v216 = vpop.f32.mrf.mxu0
  %v217 = vadd.f32 %v90, %v216
  %v218 = vpop.f32.mrf.mxu0
  %v219 = vadd.f32 %v90, %v218
  %220 = vmatmul.bf16.gmra.mxu0 %v127
  %v221 = vpop.f32.mrf.mxu0
  %v222 = vadd.f32 %v90, %v221
  %v223 = vpop.f32.mrf.mxu0
  %v224 = vadd.f32 %v90, %v223
  %225 = vmatmul.bf16.gmra.mxu0 %v130
  %v226 = vpop.f32.mrf.mxu0
  %v227 = vadd.f32 %v90, %v226
  %v228 = vpop.f32.mrf.mxu0
  %v229 = vadd.f32 %v90, %v228
  %230 = vmatmul.bf16.gmra.mxu0 %v133
  %v231 = vpop.f32.mrf.mxu0
  %v232 = vadd.f32 %v90, %v231
  %v233 = vpop.f32.mrf.mxu0
  %v234 = vadd.f32 %v90, %v233
  %235 = vmatmul.bf16.gmra.mxu0 %v136
  %v236 = vpop.f32.mrf.mxu0
  %v237 = vadd.f32 %v90, %v236
  %v238 = vpop.f32.mrf.mxu0
  %v239 = vadd.f32 %v90, %v238
  %240 = vmatmul.bf16.gmra.mxu0 %v139
  %v241 = vpop.f32.mrf.mxu0
  %v242 = vadd.f32 %v90, %v241
  %v243 = vpop.f32.mrf.mxu0
  %v244 = vadd.f32 %v90, %v243
  %245 = vmatmul.bf16.gmra.mxu0 %v142
  %v246 = vpop.f32.mrf.mxu0
  %v247 = vadd.f32 %v90, %v246
  %v248 = vpop.f32.mrf.mxu0
  %v249 = vadd.f32 %v90, %v248
  %250 = vmatmul.bf16.gmra.mxu0 %v145
  %v251 = vpop.f32.mrf.mxu0
  %v252 = vadd.f32 %v90, %v251
  %v253 = vpop.f32.mrf.mxu0
  %v254 = vadd.f32 %v90, %v253
  %255 = vmatmul.bf16.gmra.mxu0 %v148
  %v256 = vpop.f32.mrf.mxu0
  %v257 = vadd.f32 %v90, %v256
  %v258 = vpop.f32.mrf.mxu0
  %v259 = vadd.f32 %v90, %v258
  %260 = vmatmul.bf16.gmra.mxu0 %v151
  %v261 = vpop.f32.mrf.mxu0
  %v262 = vadd.f32 %v90, %v261
  %v263 = vpop.f32.mrf.mxu0
  %v264 = vadd.f32 %v90, %v263
  %265 = vdwg.mxu0
  %v266 = vmax.f32 %v167, 0.0
  %v267 = vmax.f32 %v169, 0.0
  %v268 = vmax.f32 %v172, 0.0
  %v269 = vmax.f32 %v174, 0.0
  %v270 = vmax.f32 %v177, 0.0
  %v271 = vmax.f32 %v179, 0.0
  %v272 = vmax.f32 %v182, 0.0
  %v273 = vmax.f32 %v184, 0.0
  %v274 = vmax.f32 %v187, 0.0
  %v275 = vmax.f32 %v189, 0.0
  %v276 = vmax.f32 %v192, 0.0
  %v277 = vmax.f32 %v194, 0.0
  %v278 = vmax.f32 %v197, 0.0
  %v279 = vmax.f32 %v199, 0.0
  %v280 = vmax.f32 %v202, 0.0
  %v281 = vmax.f32 %v204, 0.0
  %v282 = vmax.f32 %v207, 0.0
  %v283 = vmax.f32 %v209, 0.0
  %v284 = vmax.f32 %v212, 0.0
  %v285 = vmax.f32 %v214, 0.0
  %v286 = vmax.f32 %v217, 0.0
  %v287 = vmax.f32 %v219, 0.0
  %v288 = vmax.f32 %v222, 0.0
  %v289 = vmax.f32 %v224, 0.0
  %v290 = vmax.f32 %v227, 0.0
  %v291 = vmax.f32 %v229, 0.0
  %v292 = vmax.f32 %v232, 0.0
  %v293 = vmax.f32 %v234, 0.0
  %v294 = vmax.f32 %v237, 0.0
  %v295 = vmax.f32 %v239, 0.0
  %v296 = vmax.f32 %v242, 0.0
  %v297 = vmax.f32 %v244, 0.0
  %v298 = vmax.f32 %v247, 0.0
  %v299 = vmax.f32 %v249, 0.0
  %v300 = vmax.f32 %v252, 0.0
  %v301 = vmax.f32 %v254, 0.0
  %v302 = vmax.f32 %v257, 0.0
  %v303 = vmax.f32 %v259, 0.0
  %v304 = vmax.f32 %v262, 0.0
  %v305 = vmax.f32 %v264, 0.0
  %v306 = vlaneseq
  %v307 = vshrl.u32 %v306, 7
  %v308 = vadd.s32 %v307, 8
  %vm309 = vcmp.ge.s32.totalorder %v307, 1
  %vm310 = vcmp.ge.s32.totalorder %v308, 1
  %vm311 = vmand 0, %vm309
  %vm312 = vmand 0, %vm310
  %vm313 = vmand 1, %vm309
  %vm314 = vmand 1, %vm310
  %vm315 = vcmp.le.s32.totalorder %v307, 7
  %vm316 = vcmp.le.s32.totalorder %v308, 7
  %vm317 = vmand %vm311, %vm315
  %vm318 = vmand %vm312, %vm316
  %vm319 = vmand %vm313, %vm315
  %vm320 = vmand %vm314, %vm316
  %v321 = vsel %vm317, %v266, 0.0
  %v322 = vsel %vm318, %v267, 0.0
  %v323 = vsel %vm319, %v268, 0.0
  %v324 = vsel %vm320, %v269, 0.0
  %v325 = vsel %vm319, %v270, 0.0
  %v326 = vsel %vm320, %v271, 0.0
  %v327 = vsel %vm319, %v272, 0.0
  %v328 = vsel %vm320, %v273, 0.0
  %v329 = vsel %vm319, %v274, 0.0
  %v330 = vsel %vm320, %v275, 0.0
  %v331 = vsel %vm319, %v276, 0.0
  %v332 = vsel %vm320, %v277, 0.0
  %v333 = vsel %vm319, %v278, 0.0
  %v334 = vsel %vm320, %v279, 0.0
  %v335 = vsel %vm319, %v280, 0.0
  %v336 = vsel %vm320, %v281, 0.0
  %v337 = vsel %vm317, %v282, 0.0
  %v338 = vsel %vm318, %v283, 0.0
  %v339 = vsel %vm317, %v284, 0.0
  %v340 = vsel %vm318, %v285, 0.0
  %v341 = vsel %vm317, %v286, 0.0
  %v342 = vsel %vm318, %v287, 0.0
  %v343 = vsel %vm319, %v288, 0.0
  %v344 = vsel %vm320, %v289, 0.0
  %v345 = vsel %vm319, %v290, 0.0
  %v346 = vsel %vm320, %v291, 0.0
  %v347 = vsel %vm319, %v292, 0.0
  %v348 = vsel %vm320, %v293, 0.0
  %v349 = vsel %vm319, %v294, 0.0
  %v350 = vsel %vm320, %v295, 0.0
  %v351 = vsel %vm319, %v296, 0.0
  %v352 = vsel %vm320, %v297, 0.0
  %v353 = vsel %vm319, %v298, 0.0
  %v354 = vsel %vm320, %v299, 0.0
  %v355 = vsel %vm319, %v300, 0.0
  %v356 = vsel %vm320, %v301, 0.0
  %v357 = vsel %vm317, %v302, 0.0
  %v358 = vsel %vm318, %v303, 0.0
  %v359 = vsel %vm317, %v304, 0.0
  %v360 = vsel %vm318, %v305, 0.0
  %361 = vst [vmem:[#allocation2] sm:$0xff] %v321
  %362 = vst [vmem:[#allocation2 + $0x8] sm:$0xff] %v322
  %363 = vst [vmem:[#allocation2 + $0x10] sm:$0xff] %v323
  %364 = vst [vmem:[#allocation2 + $0x18] sm:$0xff] %v324
  %365 = vst [vmem:[#allocation2 + $0x20] sm:$0xff] %v325
  %366 = vst [vmem:[#allocation2 + $0x28] sm:$0xff] %v326
  %367 = vst [vmem:[#allocation2 + $0x30] sm:$0xff] %v327
  %368 = vst [vmem:[#allocation2 + $0x38] sm:$0xff] %v328
  %369 = vst [vmem:[#allocation2 + $0x40] sm:$0xff] %v329
  %370 = vst [vmem:[#allocation2 + $0x48] sm:$0xff] %v330
  %371 = vst [vmem:[#allocation2 + $0x50] sm:$0xff] %v331
  %372 = vst [vmem:[#allocation2 + $0x58] sm:$0xff] %v332
  %373 = vst [vmem:[#allocation2 + $0x60] sm:$0xff] %v333
  %374 = vst [vmem:[#allocation2 + $0x68] sm:$0xff] %v334
  %375 = vst [vmem:[#allocation2 + $0x70] sm:$0xff] %v335
  %376 = vst [vmem:[#allocation2 + $0x78] sm:$0xff] %v336
  %377 = vst [vmem:[#allocation2 + $0x80] sm:$0xff] %v337
  %378 = vst [vmem:[#allocation2 + $0x88] sm:$0xff] %v338
  %379 = vst [vmem:[#allocation2 + $0x90] sm:$0xff] %v339
  %380 = vst [vmem:[#allocation2 + $0x98] sm:$0xff] %v340
  %381 = vst [vmem:[#allocation2 + $0xa0] sm:$0xff] %v341
  %382 = vst [vmem:[#allocation2 + $0xa8] sm:$0xff] %v342
  %383 = vst [vmem:[#allocation2 + $0xb0] sm:$0xff] %v343
  %384 = vst [vmem:[#allocation2 + $0xb8] sm:$0xff] %v344
  %385 = vst [vmem:[#allocation2 + $0xc0] sm:$0xff] %v345
  %386 = vst [vmem:[#allocation2 + $0xc8] sm:$0xff] %v346
  %387 = vst [vmem:[#allocation2 + $0xd0] sm:$0xff] %v347
  %388 = vst [vmem:[#allocation2 + $0xd8] sm:$0xff] %v348
  %389 = vst [vmem:[#allocation2 + $0xe0] sm:$0xff] %v349
  %390 = vst [vmem:[#allocation2 + $0xe8] sm:$0xff] %v350
  %391 = vst [vmem:[#allocation2 + $0xf0] sm:$0xff] %v351
  %392 = vst [vmem:[#allocation2 + $0xf8] sm:$0xff] %v352
  %393 = vst [vmem:[#allocation2 + $0x100] sm:$0xff] %v353
  %394 = vst [vmem:[#allocation2 + $0x108] sm:$0xff] %v354
  %395 = vst [vmem:[#allocation2 + $0x110] sm:$0xff] %v355
  %396 = vst [vmem:[#allocation2 + $0x118] sm:$0xff] %v356
  %397 = vst [vmem:[#allocation2 + $0x120] sm:$0xff] %v357
  %398 = vst [vmem:[#allocation2 + $0x128] sm:$0xff] %v358
  %399 = vst [vmem:[#allocation2 + $0x130] sm:$0xff] %v359
  %400 = vst [vmem:[#allocation2 + $0x138] sm:$0xff] %v360
  %v401 = vld [vmem:[#allocation2] sm:$0xff]
  %v402 = vld [vmem:[#allocation2 + $0x10] sm:$0xff]
  %v403 = vld [vmem:[#allocation2 + $0x20] sm:$0xff]
  %v404 = vld [vmem:[#allocation2 + $0x30] sm:$0xff]
  %v405 = vld [vmem:[#allocation2 + $0x40] sm:$0xff]
  %v406 = vld [vmem:[#allocation2 + $0x50] sm:$0xff]
  %v407 = vld [vmem:[#allocation2 + $0x60] sm:$0xff]
  %v408 = vld [vmem:[#allocation2 + $0x70] sm:$0xff]
  %v409 = vld [vmem:[#allocation2 + $0x80] sm:$0xff]
  %v410 = vld [vmem:[#allocation2 + $0x90] sm:$0xff]
  %v411 = vld [vmem:[#allocation2 + $0xa0] sm:$0xff]
  %v412 = vld [vmem:[#allocation2 + $0xb0] sm:$0xff]
  %v413 = vld [vmem:[#allocation2 + $0xc0] sm:$0xff]
  %v414 = vld [vmem:[#allocation2 + $0xd0] sm:$0xff]
  %v415 = vld [vmem:[#allocation2 + $0xe0] sm:$0xff]
  %v416 = vld [vmem:[#allocation2 + $0xf0] sm:$0xff]
  %v417 = vld [vmem:[#allocation2 + $0x100] sm:$0xff]
  %v418 = vld [vmem:[#allocation2 + $0x110] sm:$0xff]
  %v419 = vld [vmem:[#allocation2 + $0x120] sm:$0xff]
  %v420 = vld [vmem:[#allocation2 + $0x130] sm:$0xff]
  %v421 = vpack.c.bf16 %v401, %v401
  %v422 = vpack.c.bf16 %v402, %v402
  %v423 = vpack.c.bf16 %v403, %v403
  %v424 = vpack.c.bf16 %v404, %v404
  %v425 = vpack.c.bf16 %v405, %v405
  %v426 = vpack.c.bf16 %v406, %v406
  %v427 = vpack.c.bf16 %v407, %v407
  %v428 = vpack.c.bf16 %v408, %v408
  %v429 = vpack.c.bf16 %v411, %v411
  %v430 = vpack.c.bf16 %v412, %v412
  %v431 = vpack.c.bf16 %v413, %v413
  %v432 = vpack.c.bf16 %v414, %v414
  %v433 = vpack.c.bf16 %v415, %v415
  %v434 = vpack.c.bf16 %v416, %v416
  %v435 = vpack.c.bf16 %v417, %v417
  %v436 = vpack.c.bf16 %v418, %v418
  %437 = vst [vmem:[#allocation3] sm:$0xf] %v421
  %438 = vst [vmem:[#allocation3 + $0x24] sm:$0xf] %v422
  %439 = vst [vmem:[#allocation3 + $0x48] sm:$0xf] %v423
  %440 = vst [vmem:[#allocation3 + $0x6c] sm:$0xf] %v424
  %441 = vst [vmem:[#allocation3 + $0x90] sm:$0xf] %v425
  %442 = vst [vmem:[#allocation3 + $0xb4] sm:$0xf] %v426
  %443 = vst [vmem:[#allocation3 + $0xd8] sm:$0xf] %v427
  %444 = vst [vmem:[#allocation3 + $0xfc] sm:$0xf] %v428
  %445 = vst [vmem:[#allocation3 + $0x120] sm:$0xf] %v429
  %446 = vst [vmem:[#allocation3 + $0x144] sm:$0xf] %v430
  %447 = vst [vmem:[#allocation3 + $0x168] sm:$0xf] %v431
  %448 = vst [vmem:[#allocation3 + $0x18c] sm:$0xf] %v432
  %449 = vst [vmem:[#allocation3 + $0x1b0] sm:$0xf] %v433
  %450 = vst [vmem:[#allocation3 + $0x1d4] sm:$0xf] %v434
  %451 = vst [vmem:[#allocation3 + $0x1f8] sm:$0xf] %v435
  %452 = vst [vmem:[#allocation3 + $0x21c] sm:$0xf] %v436
  %v453 = vpack.c.bf16 %v409, %v409
  %v454 = vpack.c.bf16 %v419, %v419
  %455 = vst [vmem:[#allocation3 + $0xc] sm:$0xf] %v422
  %456 = vst [vmem:[#allocation3 + $0x30] sm:$0xf] %v423
  %457 = vst [vmem:[#allocation3 + $0x54] sm:$0xf] %v424
  %458 = vst [vmem:[#allocation3 + $0x78] sm:$0xf] %v425
  %459 = vst [vmem:[#allocation3 + $0x9c] sm:$0xf] %v426
  %460 = vst [vmem:[#allocation3 + $0xc0] sm:$0xf] %v427
  %461 = vst [vmem:[#allocation3 + $0xe4] sm:$0xf] %v428
  %462 = vst [vmem:[#allocation3 + $0x108] sm:$0xf] %v453
  %463 = vst [vmem:[#allocation3 + $0x12c] sm:$0xf] %v430
  %464 = vst [vmem:[#allocation3 + $0x150] sm:$0xf] %v431
  %465 = vst [vmem:[#allocation3 + $0x174] sm:$0xf] %v432
  %466 = vst [vmem:[#allocation3 + $0x198] sm:$0xf] %v433
  %467 = vst [vmem:[#allocation3 + $0x1bc] sm:$0xf] %v434
  %468 = vst [vmem:[#allocation3 + $0x1e0] sm:$0xf] %v435
  %469 = vst [vmem:[#allocation3 + $0x204] sm:$0xf] %v436
  %470 = vst [vmem:[#allocation3 + $0x228] sm:$0xf] %v454
  %v471 = vpack.c.bf16 %v410, %v410
  %v472 = vpack.c.bf16 %v420, %v420
  %473 = vst [vmem:[#allocation3 + $0x18] sm:$0xf] %v423
  %474 = vst [vmem:[#allocation3 + $0x3c] sm:$0xf] %v424
  %475 = vst [vmem:[#allocation3 + $0x60] sm:$0xf] %v425
  %476 = vst [vmem:[#allocation3 + $0x84] sm:$0xf] %v426
  %477 = vst [vmem:[#allocation3 + $0xa8] sm:$0xf] %v427
  %478 = vst [vmem:[#allocation3 + $0xcc] sm:$0xf] %v428
  %479 = vst [vmem:[#allocation3 + $0xf0] sm:$0xf] %v453
  %480 = vst [vmem:[#allocation3 + $0x114] sm:$0xf] %v471
  %481 = vst [vmem:[#allocation3 + $0x138] sm:$0xf] %v431
  %482 = vst [vmem:[#allocation3 + $0x15c] sm:$0xf] %v432
  %483 = vst [vmem:[#allocation3 + $0x180] sm:$0xf] %v433
  %484 = vst [vmem:[#allocation3 + $0x1a4] sm:$0xf] %v434
  %485 = vst [vmem:[#allocation3 + $0x1c8] sm:$0xf] %v435
  %486 = vst [vmem:[#allocation3 + $0x1ec] sm:$0xf] %v436
  %487 = vst [vmem:[#allocation3 + $0x210] sm:$0xf] %v454
  %488 = vst [vmem:[#allocation3 + $0x234] sm:$0xf] %v472
  %v489 = vld [vmem:[#allocation2 + $0x1] sm:$0xff]
  %v490 = vld [vmem:[#allocation2 + $0x11] sm:$0xff]
  %v491 = vld [vmem:[#allocation2 + $0x21] sm:$0xff]
  %v492 = vld [vmem:[#allocation2 + $0x31] sm:$0xff]
  %v493 = vld [vmem:[#allocation2 + $0x41] sm:$0xff]
  %v494 = vld [vmem:[#allocation2 + $0x51] sm:$0xff]
  %v495 = vld [vmem:[#allocation2 + $0x61] sm:$0xff]
  %v496 = vld [vmem:[#allocation2 + $0x71] sm:$0xff]
  %v497 = vld [vmem:[#allocation2 + $0x81] sm:$0xff]
  %v498 = vld [vmem:[#allocation2 + $0x91] sm:$0xff]
  %v499 = vld [vmem:[#allocation2 + $0xa1] sm:$0xff]
  %v500 = vld [vmem:[#allocation2 + $0xb1] sm:$0xff]
  %v501 = vld [vmem:[#allocation2 + $0xc1] sm:$0xff]
  %v502 = vld [vmem:[#allocation2 + $0xd1] sm:$0xff]
  %v503 = vld [vmem:[#allocation2 + $0xe1] sm:$0xff]
  %v504 = vld [vmem:[#allocation2 + $0xf1] sm:$0xff]
  %v505 = vld [vmem:[#allocation2 + $0x101] sm:$0xff]
  %v506 = vld [vmem:[#allocation2 + $0x111] sm:$0xff]
  %v507 = vld [vmem:[#allocation2 + $0x121] sm:$0xff]
  %v508 = vld [vmem:[#allocation2 + $0x131] sm:$0xff]
  %v509 = vpack.c.bf16 %v489, %v489
  %v510 = vpack.c.bf16 %v490, %v490
  %v511 = vpack.c.bf16 %v491, %v491
  %v512 = vpack.c.bf16 %v492, %v492
  %v513 = vpack.c.bf16 %v493, %v493
  %v514 = vpack.c.bf16 %v494, %v494
  %v515 = vpack.c.bf16 %v495, %v495
  %v516 = vpack.c.bf16 %v496, %v496
  %v517 = vpack.c.bf16 %v499, %v499
  %v518 = vpack.c.bf16 %v500, %v500
  %v519 = vpack.c.bf16 %v501, %v501
  %v520 = vpack.c.bf16 %v502, %v502
  %v521 = vpack.c.bf16 %v503, %v503
  %v522 = vpack.c.bf16 %v504, %v504
  %v523 = vpack.c.bf16 %v505, %v505
  %v524 = vpack.c.bf16 %v506, %v506
  %525 = vst [vmem:[#allocation3 + $0x4] sm:$0xf] %v509
  %526 = vst [vmem:[#allocation3 + $0x28] sm:$0xf] %v510
  %527 = vst [vmem:[#allocation3 + $0x4c] sm:$0xf] %v511
  %528 = vst [vmem:[#allocation3 + $0x70] sm:$0xf] %v512
  %529 = vst [vmem:[#allocation3 + $0x94] sm:$0xf] %v513
  %530 = vst [vmem:[#allocation3 + $0xb8] sm:$0xf] %v514
  %531 = vst [vmem:[#allocation3 + $0xdc] sm:$0xf] %v515
  %532 = vst [vmem:[#allocation3 + $0x100] sm:$0xf] %v516
  %533 = vst [vmem:[#allocation3 + $0x124] sm:$0xf] %v517
  %534 = vst [vmem:[#allocation3 + $0x148] sm:$0xf] %v518
  %535 = vst [vmem:[#allocation3 + $0x16c] sm:$0xf] %v519
  %536 = vst [vmem:[#allocation3 + $0x190] sm:$0xf] %v520
  %537 = vst [vmem:[#allocation3 + $0x1b4] sm:$0xf] %v521
  %538 = vst [vmem:[#allocation3 + $0x1d8] sm:$0xf] %v522
  %539 = vst [vmem:[#allocation3 + $0x1fc] sm:$0xf] %v523
  %540 = vst [vmem:[#allocation3 + $0x220] sm:$0xf] %v524
  %v541 = vpack.c.bf16 %v497, %v497
  %v542 = vpack.c.bf16 %v507, %v507
  %543 = vst [vmem:[#allocation3 + $0x10] sm:$0xf] %v510
  %544 = vst [vmem:[#allocation3 + $0x34] sm:$0xf] %v511
  %545 = vst [vmem:[#allocation3 + $0x58] sm:$0xf] %v512
  %546 = vst [vmem:[#allocation3 + $0x7c] sm:$0xf] %v513
  %547 = vst [vmem:[#allocation3 + $0xa0] sm:$0xf] %v514
  %548 = vst [vmem:[#allocation3 + $0xc4] sm:$0xf] %v515
  %549 = vst [vmem:[#allocation3 + $0xe8] sm:$0xf] %v516
  %550 = vst [vmem:[#allocation3 + $0x10c] sm:$0xf] %v541
  %551 = vst [vmem:[#allocation3 + $0x130] sm:$0xf] %v518
  %552 = vst [vmem:[#allocation3 + $0x154] sm:$0xf] %v519
  %553 = vst [vmem:[#allocation3 + $0x178] sm:$0xf] %v520
  %554 = vst [vmem:[#allocation3 + $0x19c] sm:$0xf] %v521
  %555 = vst [vmem:[#allocation3 + $0x1c0] sm:$0xf] %v522
  %556 = vst [vmem:[#allocation3 + $0x1e4] sm:$0xf] %v523
  %557 = vst [vmem:[#allocation3 + $0x208] sm:$0xf] %v524
  %558 = vst [vmem:[#allocation3 + $0x22c] sm:$0xf] %v542
  %v559 = vpack.c.bf16 %v498, %v498
  %v560 = vpack.c.bf16 %v508, %v508
  %561 = vst [vmem:[#allocation3 + $0x1c] sm:$0xf] %v511
  %562 = vst [vmem:[#allocation3 + $0x40] sm:$0xf] %v512
  %563 = vst [vmem:[#allocation3 + $0x64] sm:$0xf] %v513
  %564 = vst [vmem:[#allocation3 + $0x88] sm:$0xf] %v514
  %565 = vst [vmem:[#allocation3 + $0xac] sm:$0xf] %v515
  %566 = vst [vmem:[#allocation3 + $0xd0] sm:$0xf] %v516
  %567 = vst [vmem:[#allocation3 + $0xf4] sm:$0xf] %v541
  %568 = vst [vmem:[#allocation3 + $0x118] sm:$0xf] %v559
  %569 = vst [vmem:[#allocation3 + $0x13c] sm:$0xf] %v519
  %570 = vst [vmem:[#allocation3 + $0x160] sm:$0xf] %v520
  %571 = vst [vmem:[#allocation3 + $0x184] sm:$0xf] %v521
  %572 = vst [vmem:[#allocation3 + $0x1a8] sm:$0xf] %v522
  %573 = vst [vmem:[#allocation3 + $0x1cc] sm:$0xf] %v523
  %574 = vst [vmem:[#allocation3 + $0x1f0] sm:$0xf] %v524
  %575 = vst [vmem:[#allocation3 + $0x214] sm:$0xf] %v542
  %576 = vst [vmem:[#allocation3 + $0x238] sm:$0xf] %v560
  %v577 = vld [vmem:[#allocation2 + $0x2] sm:$0xff]
  %v578 = vld [vmem:[#allocation2 + $0x12] sm:$0xff]
  %v579 = vld [vmem:[#allocation2 + $0x22] sm:$0xff]
  %v580 = vld [vmem:[#allocation2 + $0x32] sm:$0xff]
  %v581 = vld [vmem:[#allocation2 + $0x42] sm:$0xff]
  %v582 = vld [vmem:[#allocation2 + $0x52] sm:$0xff]
  %v583 = vld [vmem:[#allocation2 + $0x62] sm:$0xff]
  %v584 = vld [vmem:[#allocation2 + $0x72] sm:$0xff]
  %v585 = vld [vmem:[#allocation2 + $0x82] sm:$0xff]
  %v586 = vld [vmem:[#allocation2 + $0x92] sm:$0xff]
  %v587 = vld [vmem:[#allocation2 + $0xa2] sm:$0xff]
  %v588 = vld [vmem:[#allocation2 + $0xb2] sm:$0xff]
  %v589 = vld [vmem:[#allocation2 + $0xc2] sm:$0xff]
  %v590 = vld [vmem:[#allocation2 + $0xd2] sm:$0xff]
  %v591 = vld [vmem:[#allocation2 + $0xe2] sm:$0xff]
  %v592 = vld [vmem:[#allocation2 + $0xf2] sm:$0xff]
  %v593 = vld [vmem:[#allocation2 + $0x102] sm:$0xff]
  %v594 = vld [vmem:[#allocation2 + $0x112] sm:$0xff]
  %v595 = vld [vmem:[#allocation2 + $0x122] sm:$0xff]
  %v596 = vld [vmem:[#allocation2 + $0x132] sm:$0xff]
  %v597 = vpack.c.bf16 %v577, %v577
  %v598 = vpack.c.bf16 %v578, %v578
  %v599 = vpack.c.bf16 %v579, %v579
  %v600 = vpack.c.bf16 %v580, %v580
  %v601 = vpack.c.bf16 %v581, %v581
  %v602 = vpack.c.bf16 %v582, %v582
  %v603 = vpack.c.bf16 %v583, %v583
  %v604 = vpack.c.bf16 %v584, %v584
  %v605 = vpack.c.bf16 %v587, %v587
  %v606 = vpack.c.bf16 %v588, %v588
  %v607 = vpack.c.bf16 %v589, %v589
  %v608 = vpack.c.bf16 %v590, %v590
  %v609 = vpack.c.bf16 %v591, %v591
  %v610 = vpack.c.bf16 %v592, %v592
  %v611 = vpack.c.bf16 %v593, %v593
  %v612 = vpack.c.bf16 %v594, %v594
  %613 = vst [vmem:[#allocation3 + $0x8] sm:$0xf] %v597
  %614 = vst [vmem:[#allocation3 + $0x2c] sm:$0xf] %v598
  %615 = vst [vmem:[#allocation3 + $0x50] sm:$0xf] %v599
  %616 = vst [vmem:[#allocation3 + $0x74] sm:$0xf] %v600
  %617 = vst [vmem:[#allocation3 + $0x98] sm:$0xf] %v601
  %618 = vst [vmem:[#allocation3 + $0xbc] sm:$0xf] %v602
  %619 = vst [vmem:[#allocation3 + $0xe0] sm:$0xf] %v603
  %620 = vst [vmem:[#allocation3 + $0x104] sm:$0xf] %v604
  %621 = vst [vmem:[#allocation3 + $0x128] sm:$0xf] %v605
  %622 = vst [vmem:[#allocation3 + $0x14c] sm:$0xf] %v606
  %623 = vst [vmem:[#allocation3 + $0x170] sm:$0xf] %v607
  %624 = vst [vmem:[#allocation3 + $0x194] sm:$0xf] %v608
  %625 = vst [vmem:[#allocation3 + $0x1b8] sm:$0xf] %v609
  %626 = vst [vmem:[#allocation3 + $0x1dc] sm:$0xf] %v610
  %627 = vst [vmem:[#allocation3 + $0x200] sm:$0xf] %v611
  %628 = vst [vmem:[#allocation3 + $0x224] sm:$0xf] %v612
  %v629 = vpack.c.bf16 %v585, %v585
  %v630 = vpack.c.bf16 %v595, %v595
  %631 = vst [vmem:[#allocation3 + $0x14] sm:$0xf] %v598
  %632 = vst [vmem:[#allocation3 + $0x38] sm:$0xf] %v599
  %633 = vst [vmem:[#allocation3 + $0x5c] sm:$0xf] %v600
  %634 = vst [vmem:[#allocation3 + $0x80] sm:$0xf] %v601
  %635 = vst [vmem:[#allocation3 + $0xa4] sm:$0xf] %v602
  %636 = vst [vmem:[#allocation3 + $0xc8] sm:$0xf] %v603
  %637 = vst [vmem:[#allocation3 + $0xec] sm:$0xf] %v604
  %638 = vst [vmem:[#allocation3 + $0x110] sm:$0xf] %v629
  %639 = vst [vmem:[#allocation3 + $0x134] sm:$0xf] %v606
  %640 = vst [vmem:[#allocation3 + $0x158] sm:$0xf] %v607
  %641 = vst [vmem:[#allocation3 + $0x17c] sm:$0xf] %v608
  %642 = vst [vmem:[#allocation3 + $0x1a0] sm:$0xf] %v609
  %643 = vst [vmem:[#allocation3 + $0x1c4] sm:$0xf] %v610
  %644 = vst [vmem:[#allocation3 + $0x1e8] sm:$0xf] %v611
  %645 = vst [vmem:[#allocation3 + $0x20c] sm:$0xf] %v612
  %646 = vst [vmem:[#allocation3 + $0x230] sm:$0xf] %v630
  %v647 = vpack.c.bf16 %v586, %v586
  %v648 = vpack.c.bf16 %v596, %v596
  %649 = vst [vmem:[#allocation3 + $0x20] sm:$0xf] %v599
  %650 = vst [vmem:[#allocation3 + $0x44] sm:$0xf] %v600
  %651 = vst [vmem:[#allocation3 + $0x68] sm:$0xf] %v601
  %652 = vst [vmem:[#allocation3 + $0x8c] sm:$0xf] %v602
  %653 = vst [vmem:[#allocation3 + $0xb0] sm:$0xf] %v603
  %654 = vst [vmem:[#allocation3 + $0xd4] sm:$0xf] %v604
  %655 = vst [vmem:[#allocation3 + $0xf8] sm:$0xf] %v629
  %656 = vst [vmem:[#allocation3 + $0x11c] sm:$0xf] %v647
  %657 = vst [vmem:[#allocation3 + $0x140] sm:$0xf] %v607
  %658 = vst [vmem:[#allocation3 + $0x164] sm:$0xf] %v608
  %659 = vst [vmem:[#allocation3 + $0x188] sm:$0xf] %v609
  %660 = vst [vmem:[#allocation3 + $0x1ac] sm:$0xf] %v610
  %661 = vst [vmem:[#allocation3 + $0x1d0] sm:$0xf] %v611
  %662 = vst [vmem:[#allocation3 + $0x1f4] sm:$0xf] %v612
  %663 = vst [vmem:[#allocation3 + $0x218] sm:$0xf] %v630
  %664 = vst [vmem:[#allocation3 + $0x23c] sm:$0xf] %v648
  %v665 = vld [vmem:[#allocation3] sm:$0xff]
  %v666 = vld [vmem:[#allocation3 + $0x8] sm:$0xff]
  %v667 = vld [vmem:[#allocation3 + $0x10] sm:$0xff]
  %v668 = vld [vmem:[#allocation3 + $0x18] sm:$0xff]
  %v669 = vld [vmem:[#allocation3 + $0x20] sm:$0xf]
  %v670 = vld [vmem:[#allocation3 + $0x24] sm:$0xff]
  %v671 = vld [vmem:[#allocation3 + $0x2c] sm:$0xff]
  %v672 = vld [vmem:[#allocation3 + $0x34] sm:$0xff]
  %v673 = vld [vmem:[#allocation3 + $0x3c] sm:$0xff]
  %v674 = vld [vmem:[#allocation3 + $0x44] sm:$0xf]
  %v675 = vld [vmem:[#allocation3 + $0x48] sm:$0xff]
  %v676 = vld [vmem:[#allocation3 + $0x50] sm:$0xff]
  %v677 = vld [vmem:[#allocation3 + $0x58] sm:$0xff]
  %v678 = vld [vmem:[#allocation3 + $0x60] sm:$0xff]
  %v679 = vld [vmem:[#allocation3 + $0x68] sm:$0xf]
  %v680 = vld [vmem:[#allocation3 + $0x6c] sm:$0xff]
  %v681 = vld [vmem:[#allocation3 + $0x74] sm:$0xff]
  %v682 = vld [vmem:[#allocation3 + $0x7c] sm:$0xff]
  %v683 = vld [vmem:[#allocation3 + $0x84] sm:$0xff]
  %v684 = vld [vmem:[#allocation3 + $0x8c] sm:$0xf]
  %v685 = vld [vmem:[#allocation3 + $0x90] sm:$0xff]
  %v686 = vld [vmem:[#allocation3 + $0x98] sm:$0xff]
  %v687 = vld [vmem:[#allocation3 + $0xa0] sm:$0xff]
  %v688 = vld [vmem:[#allocation3 + $0xa8] sm:$0xff]
  %v689 = vld [vmem:[#allocation3 + $0xb0] sm:$0xf]
  %v690 = vld [vmem:[#allocation3 + $0xb4] sm:$0xff]
  %v691 = vld [vmem:[#allocation3 + $0xbc] sm:$0xff]
  %v692 = vld [vmem:[#allocation3 + $0xc4] sm:$0xff]
  %v693 = vld [vmem:[#allocation3 + $0xcc] sm:$0xff]
  %v694 = vld [vmem:[#allocation3 + $0xd4] sm:$0xf]
  %v695 = vld [vmem:[#allocation3 + $0xd8] sm:$0xff]
  %v696 = vld [vmem:[#allocation3 + $0xe0] sm:$0xff]
  %v697 = vld [vmem:[#allocation3 + $0xe8] sm:$0xff]
  %v698 = vld [vmem:[#allocation3 + $0xf0] sm:$0xff]
  %v699 = vld [vmem:[#allocation3 + $0xf8] sm:$0xf]
  %v700 = vld [vmem:[#allocation3 + $0xfc] sm:$0xff]
  %v701 = vld [vmem:[#allocation3 + $0x104] sm:$0xff]
  %v702 = vld [vmem:[#allocation3 + $0x10c] sm:$0xff]
  %v703 = vld [vmem:[#allocation3 + $0x114] sm:$0xff]
  %v704 = vld [vmem:[#allocation3 + $0x11c] sm:$0xf]
  %v705 = vld [vmem:[#allocation3 + $0x120] sm:$0xff]
  %v706 = vld [vmem:[#allocation3 + $0x128] sm:$0xff]
  %v707 = vld [vmem:[#allocation3 + $0x130] sm:$0xff]
  %v708 = vld [vmem:[#allocation3 + $0x138] sm:$0xff]
  %v709 = vld [vmem:[#allocation3 + $0x140] sm:$0xf]
  %v710 = vld [vmem:[#allocation3 + $0x144] sm:$0xff]
  %v711 = vld [vmem:[#allocation3 + $0x14c] sm:$0xff]
  %v712 = vld [vmem:[#allocation3 + $0x154] sm:$0xff]
  %v713 = vld [vmem:[#allocation3 + $0x15c] sm:$0xff]
  %v714 = vld [vmem:[#allocation3 + $0x164] sm:$0xf]
  %v715 = vld [vmem:[#allocation3 + $0x168] sm:$0xff]
  %v716 = vld [vmem:[#allocation3 + $0x170] sm:$0xff]
  %v717 = vld [vmem:[#allocation3 + $0x178] sm:$0xff]
  %v718 = vld [vmem:[#allocation3 + $0x180] sm:$0xff]
  %v719 = vld [vmem:[#allocation3 + $0x188] sm:$0xf]
  %v720 = vld [vmem:[#allocation3 + $0x18c] sm:$0xff]
  %v721 = vld [vmem:[#allocation3 + $0x194] sm:$0xff]
  %v722 = vld [vmem:[#allocation3 + $0x19c] sm:$0xff]
  %v723 = vld [vmem:[#allocation3 + $0x1a4] sm:$0xff]
  %v724 = vld [vmem:[#allocation3 + $0x1ac] sm:$0xf]
  %v725 = vld [vmem:[#allocation3 + $0x1b0] sm:$0xff]
  %v726 = vld [vmem:[#allocation3 + $0x1b8] sm:$0xff]
  %v727 = vld [vmem:[#allocation3 + $0x1c0] sm:$0xff]
  %v728 = vld [vmem:[#allocation3 + $0x1c8] sm:$0xff]
  %v729 = vld [vmem:[#allocation3 + $0x1d0] sm:$0xf]
  %v730 = vld [vmem:[#allocation3 + $0x1d4] sm:$0xff]
  %v731 = vld [vmem:[#allocation3 + $0x1dc] sm:$0xff]
  %v732 = vld [vmem:[#allocation3 + $0x1e4] sm:$0xff]
  %v733 = vld [vmem:[#allocation3 + $0x1ec] sm:$0xff]
  %v734 = vld [vmem:[#allocation3 + $0x1f4] sm:$0xf]
  %v735 = vld [vmem:[#allocation3 + $0x1f8] sm:$0xff]
  %v736 = vld [vmem:[#allocation3 + $0x200] sm:$0xff]
  %v737 = vld [vmem:[#allocation3 + $0x208] sm:$0xff]
  %v738 = vld [vmem:[#allocation3 + $0x210] sm:$0xff]
  %v739 = vld [vmem:[#allocation3 + $0x218] sm:$0xf]
  %v740 = vld [vmem:[#allocation3 + $0x21c] sm:$0xff]
  %v741 = vld [vmem:[#allocation3 + $0x224] sm:$0xff]
  %v742 = vld [vmem:[#allocation3 + $0x22c] sm:$0xff]
  %v743 = vld [vmem:[#allocation3 + $0x234] sm:$0xff]
  %v744 = vld [vmem:[#allocation3 + $0x23c] sm:$0xf]
  %v745 = vld [vmem:[%s3] sm:$0xf]
  %v746 = vld [vmem:[%s3 + $0x4] sm:$0xf]
  %v747 = vld [vmem:[%s3 + $0x8] sm:$0xf]
  %v748 = vld [vmem:[%s3 + $0xc] sm:$0xf]
  %v749 = vld [vmem:[%s3 + $0x10] sm:$0xf]
  %v750 = vld [vmem:[%s3 + $0x14] sm:$0xf]
  %v751 = vld [vmem:[%s3 + $0x18] sm:$0xf]
  %v752 = vld [vmem:[%s3 + $0x1c] sm:$0xf]
  %v753 = vld [vmem:[%s3 + $0x20] sm:$0xf]
  %v754 = vld [vmem:[%s3 + $0x24] sm:$0xf]
  %v755 = vld [vmem:[%s3 + $0x28] sm:$0xf]
  %v756 = vld [vmem:[%s3 + $0x2c] sm:$0xf]
  %v757 = vld [vmem:[%s3 + $0x30] sm:$0xf]
  %v758 = vld [vmem:[%s3 + $0x34] sm:$0xf]
  %v759 = vld [vmem:[%s3 + $0x38] sm:$0xf]
  %v760 = vld [vmem:[%s3 + $0x3c] sm:$0xf]
  %v761 = vld [vmem:[%s3 + $0x40] sm:$0xf]
  %v762 = vld [vmem:[%s3 + $0x44] sm:$0xf]
  %v763 = vld [vmem:[%s3 + $0x48] sm:$0xf]
  %v764 = vld [vmem:[%s3 + $0x4c] sm:$0xf]
  %v765 = vld [vmem:[%s3 + $0x50] sm:$0xf]
  %v766 = vld [vmem:[%s3 + $0x54] sm:$0xf]
  %v767 = vld [vmem:[%s3 + $0x58] sm:$0xf]
  %v768 = vld [vmem:[%s3 + $0x5c] sm:$0xf]
  %v769 = vld [vmem:[%s3 + $0x60] sm:$0xf]
  %v770 = vld [vmem:[%s3 + $0x64] sm:$0xf]
  %v771 = vld [vmem:[%s3 + $0x68] sm:$0xf]
  %v772 = vld [vmem:[%s3 + $0x6c] sm:$0xf]
  %v773 = vld [vmem:[%s3 + $0x70] sm:$0xf]
  %v774 = vld [vmem:[%s3 + $0x74] sm:$0xf]
  %v775 = vld [vmem:[%s3 + $0x78] sm:$0xf]
  %v776 = vld [vmem:[%s3 + $0x7c] sm:$0xf]
  %v777 = vld [vmem:[%s3 + $0x80] sm:$0xf]
  %v778 = vld [vmem:[%s3 + $0x84] sm:$0xf]
  %v779 = vld [vmem:[%s3 + $0x88] sm:$0xf]
  %v780 = vld [vmem:[%s3 + $0x8c] sm:$0xf]
  %v781 = vld [vmem:[%s3 + $0x90] sm:$0xf]
  %v782 = vld [vmem:[%s3 + $0x94] sm:$0xf]
  %v783 = vld [vmem:[%s3 + $0x98] sm:$0xf]
  %v784 = vld [vmem:[%s3 + $0x9c] sm:$0xf]
  %v785 = vld [vmem:[%s3 + $0xa0] sm:$0xf]
  %v786 = vld [vmem:[%s3 + $0xa4] sm:$0xf]
  %v787 = vld [vmem:[%s3 + $0xa8] sm:$0xf]
  %v788 = vld [vmem:[%s3 + $0xac] sm:$0xf]
  %v789 = vld [vmem:[%s3 + $0xb0] sm:$0xf]
  %v790 = vld [vmem:[%s3 + $0xb4] sm:$0xf]
  %v791 = vld [vmem:[%s3 + $0xb8] sm:$0xf]
  %v792 = vld [vmem:[%s3 + $0xbc] sm:$0xf]
  %v793 = vld [vmem:[%s3 + $0xc0] sm:$0xf]
  %v794 = vld [vmem:[%s3 + $0xc4] sm:$0xf]
  %v795 = vld [vmem:[%s3 + $0xc8] sm:$0xf]
  %v796 = vld [vmem:[%s3 + $0xcc] sm:$0xf]
  %v797 = vld [vmem:[%s3 + $0xd0] sm:$0xf]
  %v798 = vld [vmem:[%s3 + $0xd4] sm:$0xf]
  %v799 = vld [vmem:[%s3 + $0xd8] sm:$0xf]
  %v800 = vld [vmem:[%s3 + $0xdc] sm:$0xf]
  %v801 = vld [vmem:[%s3 + $0xe0] sm:$0xf]
  %v802 = vld [vmem:[%s3 + $0xe4] sm:$0xf]
  %v803 = vld [vmem:[%s3 + $0xe8] sm:$0xf]
  %v804 = vld [vmem:[%s3 + $0xec] sm:$0xf]
  %v805 = vld [vmem:[%s3 + $0xf0] sm:$0xf]
  %v806 = vld [vmem:[%s3 + $0xf4] sm:$0xf]
  %v807 = vld [vmem:[%s3 + $0xf8] sm:$0xf]
  %v808 = vld [vmem:[%s3 + $0xfc] sm:$0xf]
  %v809 = vld [vmem:[%s3 + $0x100] sm:$0xf]
  %v810 = vld [vmem:[%s3 + $0x104] sm:$0xf]
  %v811 = vld [vmem:[%s3 + $0x108] sm:$0xf]
  %v812 = vld [vmem:[%s3 + $0x10c] sm:$0xf]
  %v813 = vld [vmem:[%s3 + $0x110] sm:$0xf]
  %v814 = vld [vmem:[%s3 + $0x114] sm:$0xf]
  %v815 = vld [vmem:[%s3 + $0x118] sm:$0xf]
  %v816 = vld [vmem:[%s3 + $0x11c] sm:$0xf]
  %v817 = vld [vmem:[%s3 + $0x120] sm:$0xf]
  %v818 = vld [vmem:[%s3 + $0x124] sm:$0xf]
  %v819 = vld [vmem:[%s3 + $0x128] sm:$0xf]
  %v820 = vld [vmem:[%s3 + $0x12c] sm:$0xf]
  %v821 = vld [vmem:[%s3 + $0x130] sm:$0xf]
  %v822 = vld [vmem:[%s3 + $0x134] sm:$0xf]
  %v823 = vld [vmem:[%s3 + $0x138] sm:$0xf]
  %v824 = vld [vmem:[%s3 + $0x13c] sm:$0xf]
  %v825 = vld [vmem:[%s3 + $0x140] sm:$0xf]
  %v826 = vld [vmem:[%s3 + $0x144] sm:$0xf]
  %v827 = vld [vmem:[%s3 + $0x148] sm:$0xf]
  %v828 = vld [vmem:[%s3 + $0x14c] sm:$0xf]
  %v829 = vld [vmem:[%s3 + $0x150] sm:$0xf]
  %v830 = vld [vmem:[%s3 + $0x154] sm:$0xf]
  %v831 = vld [vmem:[%s3 + $0x158] sm:$0xf]
  %v832 = vld [vmem:[%s3 + $0x15c] sm:$0xf]
  %v833 = vld [vmem:[%s3 + $0x160] sm:$0xf]
  %v834 = vld [vmem:[%s3 + $0x164] sm:$0xf]
  %v835 = vld [vmem:[%s3 + $0x168] sm:$0xf]
  %v836 = vld [vmem:[%s3 + $0x16c] sm:$0xf]
  %v837 = vld [vmem:[%s3 + $0x170] sm:$0xf]
  %v838 = vld [vmem:[%s3 + $0x174] sm:$0xf]
  %v839 = vld [vmem:[%s3 + $0x178] sm:$0xf]
  %v840 = vld [vmem:[%s3 + $0x17c] sm:$0xf]
  %v841 = vld [vmem:[%s3 + $0x180] sm:$0xf]
  %v842 = vld [vmem:[%s3 + $0x184] sm:$0xf]
  %v843 = vld [vmem:[%s3 + $0x188] sm:$0xf]
  %v844 = vld [vmem:[%s3 + $0x18c] sm:$0xf]
  %v845 = vld [vmem:[%s3 + $0x190] sm:$0xf]
  %v846 = vld [vmem:[%s3 + $0x194] sm:$0xf]
  %v847 = vld [vmem:[%s3 + $0x198] sm:$0xf]
  %v848 = vld [vmem:[%s3 + $0x19c] sm:$0xf]
  %v849 = vld [vmem:[%s3 + $0x1a0] sm:$0xf]
  %v850 = vld [vmem:[%s3 + $0x1a4] sm:$0xf]
  %v851 = vld [vmem:[%s3 + $0x1a8] sm:$0xf]
  %v852 = vld [vmem:[%s3 + $0x1ac] sm:$0xf]
  %v853 = vld [vmem:[%s3 + $0x1b0] sm:$0xf]
  %v854 = vld [vmem:[%s3 + $0x1b4] sm:$0xf]
  %v855 = vld [vmem:[%s3 + $0x1b8] sm:$0xf]
  %v856 = vld [vmem:[%s3 + $0x1bc] sm:$0xf]
  %v857 = vld [vmem:[%s3 + $0x1c0] sm:$0xf]
  %v858 = vld [vmem:[%s3 + $0x1c4] sm:$0xf]
  %v859 = vld [vmem:[%s3 + $0x1c8] sm:$0xf]
  %v860 = vld [vmem:[%s3 + $0x1cc] sm:$0xf]
  %v861 = vld [vmem:[%s3 + $0x1d0] sm:$0xf]
  %v862 = vld [vmem:[%s3 + $0x1d4] sm:$0xf]
  %v863 = vld [vmem:[%s3 + $0x1d8] sm:$0xf]
  %v864 = vld [vmem:[%s3 + $0x1dc] sm:$0xf]
  %v865 = vld [vmem:[%s3 + $0x1e0] sm:$0xf]
  %v866 = vld [vmem:[%s3 + $0x1e4] sm:$0xf]
  %v867 = vld [vmem:[%s3 + $0x1e8] sm:$0xf]
  %v868 = vld [vmem:[%s3 + $0x1ec] sm:$0xf]
  %v869 = vld [vmem:[%s3 + $0x1f0] sm:$0xf]
  %v870 = vld [vmem:[%s3 + $0x1f4] sm:$0xf]
  %v871 = vld [vmem:[%s3 + $0x1f8] sm:$0xf]
  %v872 = vld [vmem:[%s3 + $0x1fc] sm:$0xf]
  %v873 = vld [vmem:[%s3 + $0x200] sm:$0xf]
  %v874 = vld [vmem:[%s3 + $0x204] sm:$0xf]
  %v875 = vld [vmem:[%s3 + $0x208] sm:$0xf]
  %v876 = vld [vmem:[%s3 + $0x20c] sm:$0xf]
  %v877 = vld [vmem:[%s3 + $0x210] sm:$0xf]
  %v878 = vld [vmem:[%s3 + $0x214] sm:$0xf]
  %v879 = vld [vmem:[%s3 + $0x218] sm:$0xf]
  %v880 = vld [vmem:[%s3 + $0x21c] sm:$0xf]
  %v881 = vld [vmem:[%s3 + $0x220] sm:$0xf]
  %v882 = vld [vmem:[%s3 + $0x224] sm:$0xf]
  %v883 = vld [vmem:[%s3 + $0x228] sm:$0xf]
  %v884 = vld [vmem:[%s3 + $0x22c] sm:$0xf]
  %v885 = vld [vmem:[%s3 + $0x230] sm:$0xf]
  %v886 = vld [vmem:[%s3 + $0x234] sm:$0xf]
  %v887 = vld [vmem:[%s3 + $0x238] sm:$0xf]
  %v888 = vld [vmem:[%s3 + $0x23c] sm:$0xf]
  %v889 = vld [vmem:[%s4] sm:$0x1]
  %v891 = vperm.slane %v889, 0
  %v973 = vunpack.c.l.b16 %v665
  %v974 = vunpack.c.h.b16 %v665
  %v975 = vunpack.c.l.b16 %v666
  %v976 = vunpack.c.h.b16 %v666
  %v977 = vunpack.c.l.b16 %v667
  %v978 = vunpack.c.h.b16 %v667
  %v979 = vunpack.c.l.b16 %v668
  %v980 = vunpack.c.h.b16 %v668
  %v981 = vunpack.c.l.b16 %v669
  %v982 = vunpack.c.l.b16 %v670
  %v983 = vunpack.c.h.b16 %v670
  %v984 = vunpack.c.l.b16 %v671
  %v985 = vunpack.c.h.b16 %v671
  %v986 = vunpack.c.l.b16 %v672
  %v987 = vunpack.c.h.b16 %v672
  %v988 = vunpack.c.l.b16 %v673
  %v989 = vunpack.c.h.b16 %v673
  %v990 = vunpack.c.l.b16 %v674
  %v991 = vunpack.c.l.b16 %v675
  %v992 = vunpack.c.h.b16 %v675
  %v993 = vunpack.c.l.b16 %v676
  %v994 = vunpack.c.h.b16 %v676
  %v995 = vunpack.c.l.b16 %v677
  %v996 = vunpack.c.h.b16 %v677
  %v997 = vunpack.c.l.b16 %v678
  %v998 = vunpack.c.h.b16 %v678
  %v999 = vunpack.c.l.b16 %v679
  %v1000 = vunpack.c.l.b16 %v680
  %v1001 = vunpack.c.h.b16 %v680
  %v1002 = vunpack.c.l.b16 %v681
  %v1003 = vunpack.c.h.b16 %v681
  %v1004 = vunpack.c.l.b16 %v682
  %v1005 = vunpack.c.h.b16 %v682
  %v1006 = vunpack.c.l.b16 %v683
  %v1007 = vunpack.c.h.b16 %v683
  %v1008 = vunpack.c.l.b16 %v684
  %v1009 = vunpack.c.l.b16 %v685
  %v1010 = vunpack.c.h.b16 %v685
  %v1011 = vunpack.c.l.b16 %v686
  %v1012 = vunpack.c.h.b16 %v686
  %v1013 = vunpack.c.l.b16 %v687
  %v1014 = vunpack.c.h.b16 %v687
  %v1015 = vunpack.c.l.b16 %v688
  %v1016 = vunpack.c.h.b16 %v688
  %v1017 = vunpack.c.l.b16 %v689
  %v1018 = vunpack.c.l.b16 %v690
  %v1019 = vunpack.c.h.b16 %v690
  %v1020 = vunpack.c.l.b16 %v691
  %v1021 = vunpack.c.h.b16 %v691
  %v1022 = vunpack.c.l.b16 %v692
  %v1023 = vunpack.c.h.b16 %v692
  %v1024 = vunpack.c.l.b16 %v693
  %v1025 = vunpack.c.h.b16 %v693
  %v1026 = vunpack.c.l.b16 %v694
  %v1027 = vunpack.c.l.b16 %v695
  %v1028 = vunpack.c.h.b16 %v695
  %v1029 = vunpack.c.l.b16 %v696
  %v1030 = vunpack.c.h.b16 %v696
  %v1031 = vunpack.c.l.b16 %v697
  %v1032 = vunpack.c.h.b16 %v697
  %v1033 = vunpack.c.l.b16 %v698
  %v1034 = vunpack.c.h.b16 %v698
  %v1035 = vunpack.c.l.b16 %v699
  %v1036 = vunpack.c.l.b16 %v700
  %v1037 = vunpack.c.h.b16 %v700
  %v1038 = vunpack.c.l.b16 %v701
  %v1039 = vunpack.c.h.b16 %v701
  %v1040 = vunpack.c.l.b16 %v702
  %v1041 = vunpack.c.h.b16 %v702
  %v1042 = vunpack.c.l.b16 %v703
  %v1043 = vunpack.c.h.b16 %v703
  %v1044 = vunpack.c.l.b16 %v704
  %v1045 = vunpack.c.l.b16 %v705
  %v1046 = vunpack.c.h.b16 %v705
  %v1047 = vunpack.c.l.b16 %v706
  %v1048 = vunpack.c.h.b16 %v706
  %v1049 = vunpack.c.l.b16 %v707
  %v1050 = vunpack.c.h.b16 %v707
  %v1051 = vunpack.c.l.b16 %v708
  %v1052 = vunpack.c.h.b16 %v708
  %v1053 = vunpack.c.l.b16 %v709
  %v1054 = vunpack.c.l.b16 %v710
  %v1055 = vunpack.c.h.b16 %v710
  %v1056 = vunpack.c.l.b16 %v711
  %v1057 = vunpack.c.h.b16 %v711
  %v1058 = vunpack.c.l.b16 %v712
  %v1059 = vunpack.c.h.b16 %v712
  %v1060 = vunpack.c.l.b16 %v713
  %v1061 = vunpack.c.h.b16 %v713
  %v1062 = vunpack.c.l.b16 %v714
  %v1063 = vunpack.c.l.b16 %v715
  %v1064 = vunpack.c.h.b16 %v715
  %v1065 = vunpack.c.l.b16 %v716
  %v1066 = vunpack.c.h.b16 %v716
  %v1067 = vunpack.c.l.b16 %v717
  %v1068 = vunpack.c.h.b16 %v717
  %v1069 = vunpack.c.l.b16 %v718
  %v1070 = vunpack.c.h.b16 %v718
  %v1071 = vunpack.c.l.b16 %v719
  %v1072 = vunpack.c.l.b16 %v720
  %v1073 = vunpack.c.h.b16 %v720
  %v1074 = vunpack.c.l.b16 %v721
  %v1075 = vunpack.c.h.b16 %v721
  %v1076 = vunpack.c.l.b16 %v722
  %v1077 = vunpack.c.h.b16 %v722
  %v1078 = vunpack.c.l.b16 %v723
  %v1079 = vunpack.c.h.b16 %v723
  %v1080 = vunpack.c.l.b16 %v724
  %v1081 = vunpack.c.l.b16 %v725
  %v1082 = vunpack.c.h.b16 %v725
  %v1083 = vunpack.c.l.b16 %v726
  %v1084 = vunpack.c.h.b16 %v726
  %v1085 = vunpack.c.l.b16 %v727
  %v1086 = vunpack.c.h.b16 %v727
  %v1087 = vunpack.c.l.b16 %v728
  %v1088 = vunpack.c.h.b16 %v728
  %v1089 = vunpack.c.l.b16 %v729
  %v1090 = vunpack.c.l.b16 %v730
  %v1091 = vunpack.c.h.b16 %v730
  %v1092 = vunpack.c.l.b16 %v731
  %v1093 = vunpack.c.h.b16 %v731
  %v1094 = vunpack.c.l.b16 %v732
  %v1095 = vunpack.c.h.b16 %v732
  %v1096 = vunpack.c.l.b16 %v733
  %v1097 = vunpack.c.h.b16 %v733
  %v1098 = vunpack.c.l.b16 %v734
  %v1099 = vunpack.c.l.b16 %v735
  %v1100 = vunpack.c.h.b16 %v735
  %v1101 = vunpack.c.l.b16 %v736
  %v1102 = vunpack.c.h.b16 %v736
  %v1103 = vunpack.c.l.b16 %v737
  %v1104 = vunpack.c.h.b16 %v737
  %v1105 = vunpack.c.l.b16 %v738
  %v1106 = vunpack.c.h.b16 %v738
  %v1107 = vunpack.c.l.b16 %v739
  %v1108 = vunpack.c.l.b16 %v740
  %v1109 = vunpack.c.h.b16 %v740
  %v1110 = vunpack.c.l.b16 %v741
  %v1111 = vunpack.c.h.b16 %v741
  %v1112 = vunpack.c.l.b16 %v742
  %v1113 = vunpack.c.h.b16 %v742
  %v1114 = vunpack.c.l.b16 %v743
  %v1115 = vunpack.c.h.b16 %v743
  %v1116 = vunpack.c.l.b16 %v744
  %v1117 = vpack.c.b16 %v982, %v973
  %v1118 = vpack.c.b16 %v983, %v974
  %v1119 = vpack.c.b16 %v984, %v975
  %v1120 = vpack.c.b16 %v985, %v976
  %v1121 = vpack.c.b16 %v986, %v977
  %v1122 = vpack.c.b16 %v987, %v978
  %v1123 = vpack.c.b16 %v988, %v979
  %v1124 = vpack.c.b16 %v989, %v980
  %v1125 = vpack.c.b16 %v990, %v981
  %v1126 = vpack.c.b16 %v1000, %v991
  %v1127 = vpack.c.b16 %v1001, %v992
  %v1128 = vpack.c.b16 %v1002, %v993
  %v1129 = vpack.c.b16 %v1003, %v994
  %v1130 = vpack.c.b16 %v1004, %v995
  %v1131 = vpack.c.b16 %v1005, %v996
  %v1132 = vpack.c.b16 %v1006, %v997
  %v1133 = vpack.c.b16 %v1007, %v998
  %v1134 = vpack.c.b16 %v1008, %v999
  %v1135 = vpack.c.b16 %v1018, %v1009
  %v1136 = vpack.c.b16 %v1019, %v1010
  %v1137 = vpack.c.b16 %v1020, %v1011
  %v1138 = vpack.c.b16 %v1021, %v1012
  %v1139 = vpack.c.b16 %v1022, %v1013
  %v1140 = vpack.c.b16 %v1023, %v1014
  %v1141 = vpack.c.b16 %v1024, %v1015
  %v1142 = vpack.c.b16 %v1025, %v1016
  %v1143 = vpack.c.b16 %v1026, %v1017
  %v1144 = vpack.c.b16 %v1036, %v1027
  %v1145 = vpack.c.b16 %v1037, %v1028
  %v1146 = vpack.c.b16 %v1038, %v1029
  %v1147 = vpack.c.b16 %v1039, %v1030
  %v1148 = vpack.c.b16 %v1040, %v1031
  %v1149 = vpack.c.b16 %v1041, %v1032
  %v1150 = vpack.c.b16 %v1042, %v1033
  %v1151 = vpack.c.b16 %v1043, %v1034
  %v1152 = vpack.c.b16 %v1044, %v1035
  %v1153 = vpack.c.b16 %v1054, %v1045
  %v1154 = vpack.c.b16 %v1055, %v1046
  %v1155 = vpack.c.b16 %v1056, %v1047
  %v1156 = vpack.c.b16 %v1057, %v1048
  %v1157 = vpack.c.b16 %v1058, %v1049
  %v1158 = vpack.c.b16 %v1059, %v1050
  %v1159 = vpack.c.b16 %v1060, %v1051
  %v1160 = vpack.c.b16 %v1061, %v1052
  %v1161 = vpack.c.b16 %v1062, %v1053
  %v1162 = vpack.c.b16 %v1072, %v1063
  %v1163 = vpack.c.b16 %v1073, %v1064
  %v1164 = vpack.c.b16 %v1074, %v1065
  %v1165 = vpack.c.b16 %v1075, %v1066
  %v1166 = vpack.c.b16 %v1076, %v1067
  %v1167 = vpack.c.b16 %v1077, %v1068
  %v1168 = vpack.c.b16 %v1078, %v1069
  %v1169 = vpack.c.b16 %v1079, %v1070
  %v1170 = vpack.c.b16 %v1080, %v1071
  %v1171 = vpack.c.b16 %v1090, %v1081
  %v1172 = vpack.c.b16 %v1091, %v1082
  %v1173 = vpack.c.b16 %v1092, %v1083
  %v1174 = vpack.c.b16 %v1093, %v1084
  %v1175 = vpack.c.b16 %v1094, %v1085
  %v1176 = vpack.c.b16 %v1095, %v1086
  %v1177 = vpack.c.b16 %v1096, %v1087
  %v1178 = vpack.c.b16 %v1097, %v1088
  %v1179 = vpack.c.b16 %v1098, %v1089
  %v1180 = vpack.c.b16 %v1108, %v1099
  %v1181 = vpack.c.b16 %v1109, %v1100
  %v1182 = vpack.c.b16 %v1110, %v1101
  %v1183 = vpack.c.b16 %v1111, %v1102
  %v1184 = vpack.c.b16 %v1112, %v1103
  %v1185 = vpack.c.b16 %v1113, %v1104
  %v1186 = vpack.c.b16 %v1114, %v1105
  %v1187 = vpack.c.b16 %v1115, %v1106
  %v1188 = vpack.c.b16 %v1116, %v1107
  %v1405 = vunpack.c.l.b16 %v745
  %v1406 = vunpack.c.l.b16 %v746
  %v1407 = vunpack.c.l.b16 %v747
  %v1408 = vunpack.c.l.b16 %v748
  %v1409 = vunpack.c.l.b16 %v749
  %v1410 = vunpack.c.l.b16 %v750
  %v1411 = vunpack.c.l.b16 %v751
  %v1412 = vunpack.c.l.b16 %v752
  %v1413 = vunpack.c.l.b16 %v753
  %v1414 = vunpack.c.l.b16 %v754
  %v1415 = vunpack.c.l.b16 %v755
  %v1416 = vunpack.c.l.b16 %v756
  %v1417 = vunpack.c.l.b16 %v757
  %v1418 = vunpack.c.l.b16 %v758
  %v1419 = vunpack.c.l.b16 %v759
  %v1420 = vunpack.c.l.b16 %v760
  %v1421 = vunpack.c.l.b16 %v761
  %v1422 = vunpack.c.l.b16 %v762
  %v1423 = vunpack.c.l.b16 %v763
  %v1424 = vunpack.c.l.b16 %v764
  %v1425 = vunpack.c.l.b16 %v765
  %v1426 = vunpack.c.l.b16 %v766
  %v1427 = vunpack.c.l.b16 %v767
  %v1428 = vunpack.c.l.b16 %v768
  %v1429 = vunpack.c.l.b16 %v769
  %v1430 = vunpack.c.l.b16 %v770
  %v1431 = vunpack.c.l.b16 %v771
  %v1432 = vunpack.c.l.b16 %v772
  %v1433 = vunpack.c.l.b16 %v773
  %v1434 = vunpack.c.l.b16 %v774
  %v1435 = vunpack.c.l.b16 %v775
  %v1436 = vunpack.c.l.b16 %v776
  %v1437 = vunpack.c.l.b16 %v777
  %v1438 = vunpack.c.l.b16 %v778
  %v1439 = vunpack.c.l.b16 %v779
  %v1440 = vunpack.c.l.b16 %v780
  %v1441 = vunpack.c.l.b16 %v781
  %v1442 = vunpack.c.l.b16 %v782
  %v1443 = vunpack.c.l.b16 %v783
  %v1444 = vunpack.c.l.b16 %v784
  %v1445 = vunpack.c.l.b16 %v785
  %v1446 = vunpack.c.l.b16 %v786
  %v1447 = vunpack.c.l.b16 %v787
  %v1448 = vunpack.c.l.b16 %v788
  %v1449 = vunpack.c.l.b16 %v789
  %v1450 = vunpack.c.l.b16 %v790
  %v1451 = vunpack.c.l.b16 %v791
  %v1452 = vunpack.c.l.b16 %v792
  %v1453 = vunpack.c.l.b16 %v793
  %v1454 = vunpack.c.l.b16 %v794
  %v1455 = vunpack.c.l.b16 %v795
  %v1456 = vunpack.c.l.b16 %v796
  %v1457 = vunpack.c.l.b16 %v797
  %v1458 = vunpack.c.l.b16 %v798
  %v1459 = vunpack.c.l.b16 %v799
  %v1460 = vunpack.c.l.b16 %v800
  %v1461 = vunpack.c.l.b16 %v801
  %v1462 = vunpack.c.l.b16 %v802
  %v1463 = vunpack.c.l.b16 %v803
  %v1464 = vunpack.c.l.b16 %v804
  %v1465 = vunpack.c.l.b16 %v805
  %v1466 = vunpack.c.l.b16 %v806
  %v1467 = vunpack.c.l.b16 %v807
  %v1468 = vunpack.c.l.b16 %v808
  %v1469 = vunpack.c.l.b16 %v809
  %v1470 = vunpack.c.l.b16 %v810
  %v1471 = vunpack.c.l.b16 %v811
  %v1472 = vunpack.c.l.b16 %v812
  %v1473 = vunpack.c.l.b16 %v813
  %v1474 = vunpack.c.l.b16 %v814
  %v1475 = vunpack.c.l.b16 %v815
  %v1476 = vunpack.c.l.b16 %v816
  %v1477 = vunpack.c.l.b16 %v817
  %v1478 = vunpack.c.l.b16 %v818
  %v1479 = vunpack.c.l.b16 %v819
  %v1480 = vunpack.c.l.b16 %v820
  %v1481 = vunpack.c.l.b16 %v821
  %v1482 = vunpack.c.l.b16 %v822
  %v1483 = vunpack.c.l.b16 %v823
  %v1484 = vunpack.c.l.b16 %v824
  %v1485 = vunpack.c.l.b16 %v825
  %v1486 = vunpack.c.l.b16 %v826
  %v1487 = vunpack.c.l.b16 %v827
  %v1488 = vunpack.c.l.b16 %v828
  %v1489 = vunpack.c.l.b16 %v829
  %v1490 = vunpack.c.l.b16 %v830
  %v1491 = vunpack.c.l.b16 %v831
  %v1492 = vunpack.c.l.b16 %v832
  %v1493 = vunpack.c.l.b16 %v833
  %v1494 = vunpack.c.l.b16 %v834
  %v1495 = vunpack.c.l.b16 %v835
  %v1496 = vunpack.c.l.b16 %v836
  %v1497 = vunpack.c.l.b16 %v837
  %v1498 = vunpack.c.l.b16 %v838
  %v1499 = vunpack.c.l.b16 %v839
  %v1500 = vunpack.c.l.b16 %v840
  %v1501 = vunpack.c.l.b16 %v841
  %v1502 = vunpack.c.l.b16 %v842
  %v1503 = vunpack.c.l.b16 %v843
  %v1504 = vunpack.c.l.b16 %v844
  %v1505 = vunpack.c.l.b16 %v845
  %v1506 = vunpack.c.l.b16 %v846
  %v1507 = vunpack.c.l.b16 %v847
  %v1508 = vunpack.c.l.b16 %v848
  %v1509 = vunpack.c.l.b16 %v849
  %v1510 = vunpack.c.l.b16 %v850
  %v1511 = vunpack.c.l.b16 %v851
  %v1512 = vunpack.c.l.b16 %v852
  %v1513 = vunpack.c.l.b16 %v853
  %v1514 = vunpack.c.l.b16 %v854
  %v1515 = vunpack.c.l.b16 %v855
  %v1516 = vunpack.c.l.b16 %v856
  %v1517 = vunpack.c.l.b16 %v857
  %v1518 = vunpack.c.l.b16 %v858
  %v1519 = vunpack.c.l.b16 %v859
  %v1520 = vunpack.c.l.b16 %v860
  %v1521 = vunpack.c.l.b16 %v861
  %v1522 = vunpack.c.l.b16 %v862
  %v1523 = vunpack.c.l.b16 %v863
  %v1524 = vunpack.c.l.b16 %v864
  %v1525 = vunpack.c.l.b16 %v865
  %v1526 = vunpack.c.l.b16 %v866
  %v1527 = vunpack.c.l.b16 %v867
  %v1528 = vunpack.c.l.b16 %v868
  %v1529 = vunpack.c.l.b16 %v869
  %v1530 = vunpack.c.l.b16 %v870
  %v1531 = vunpack.c.l.b16 %v871
  %v1532 = vunpack.c.l.b16 %v872
  %v1533 = vunpack.c.l.b16 %v873
  %v1534 = vunpack.c.l.b16 %v874
  %v1535 = vunpack.c.l.b16 %v875
  %v1536 = vunpack.c.l.b16 %v876
  %v1537 = vunpack.c.l.b16 %v877
  %v1538 = vunpack.c.l.b16 %v878
  %v1539 = vunpack.c.l.b16 %v879
  %v1540 = vunpack.c.l.b16 %v880
  %v1541 = vunpack.c.l.b16 %v881
  %v1542 = vunpack.c.l.b16 %v882
  %v1543 = vunpack.c.l.b16 %v883
  %v1544 = vunpack.c.l.b16 %v884
  %v1545 = vunpack.c.l.b16 %v885
  %v1546 = vunpack.c.l.b16 %v886
  %v1547 = vunpack.c.l.b16 %v887
  %v1548 = vunpack.c.l.b16 %v888
  %v1549 = vpack.c.b16 %v1406, %v1405
  %v1550 = vpack.c.b16 %v1408, %v1407
  %v1551 = vpack.c.b16 %v1410, %v1409
  %v1552 = vpack.c.b16 %v1412, %v1411
  %v1553 = vpack.c.b16 %v1414, %v1413
  %v1554 = vpack.c.b16 %v1416, %v1415
  %v1555 = vpack.c.b16 %v1418, %v1417
  %v1556 = vpack.c.b16 %v1420, %v1419
  %v1557 = vpack.c.b16 %v1422, %v1421
  %v1558 = vpack.c.b16 %v1424, %v1423
  %v1559 = vpack.c.b16 %v1426, %v1425
  %v1560 = vpack.c.b16 %v1428, %v1427
  %v1561 = vpack.c.b16 %v1430, %v1429
  %v1562 = vpack.c.b16 %v1432, %v1431
  %v1563 = vpack.c.b16 %v1434, %v1433
  %v1564 = vpack.c.b16 %v1436, %v1435
  %v1565 = vpack.c.b16 %v1438, %v1437
  %v1566 = vpack.c.b16 %v1440, %v1439
  %v1567 = vpack.c.b16 %v1442, %v1441
  %v1568 = vpack.c.b16 %v1444, %v1443
  %v1569 = vpack.c.b16 %v1446, %v1445
  %v1570 = vpack.c.b16 %v1448, %v1447
  %v1571 = vpack.c.b16 %v1450, %v1449
  %v1572 = vpack.c.b16 %v1452, %v1451
  %v1573 = vpack.c.b16 %v1454, %v1453
  %v1574 = vpack.c.b16 %v1456, %v1455
  %v1575 = vpack.c.b16 %v1458, %v1457
  %v1576 = vpack.c.b16 %v1460, %v1459
  %v1577 = vpack.c.b16 %v1462, %v1461
  %v1578 = vpack.c.b16 %v1464, %v1463
  %v1579 = vpack.c.b16 %v1466, %v1465
  %v1580 = vpack.c.b16 %v1468, %v1467
  %v1581 = vpack.c.b16 %v1470, %v1469
  %v1582 = vpack.c.b16 %v1472, %v1471
  %v1583 = vpack.c.b16 %v1474, %v1473
  %v1584 = vpack.c.b16 %v1476, %v1475
  %v1585 = vpack.c.b16 %v1478, %v1477
  %v1586 = vpack.c.b16 %v1480, %v1479
  %v1587 = vpack.c.b16 %v1482, %v1481
  %v1588 = vpack.c.b16 %v1484, %v1483
  %v1589 = vpack.c.b16 %v1486, %v1485
  %v1590 = vpack.c.b16 %v1488, %v1487
  %v1591 = vpack.c.b16 %v1490, %v1489
  %v1592 = vpack.c.b16 %v1492, %v1491
  %v1593 = vpack.c.b16 %v1494, %v1493
  %v1594 = vpack.c.b16 %v1496, %v1495
  %v1595 = vpack.c.b16 %v1498, %v1497
  %v1596 = vpack.c.b16 %v1500, %v1499
  %v1597 = vpack.c.b16 %v1502, %v1501
  %v1598 = vpack.c.b16 %v1504, %v1503
  %v1599 = vpack.c.b16 %v1506, %v1505
  %v1600 = vpack.c.b16 %v1508, %v1507
  %v1601 = vpack.c.b16 %v1510, %v1509
  %v1602 = vpack.c.b16 %v1512, %v1511
  %v1603 = vpack.c.b16 %v1514, %v1513
  %v1604 = vpack.c.b16 %v1516, %v1515
  %v1605 = vpack.c.b16 %v1518, %v1517
  %v1606 = vpack.c.b16 %v1520, %v1519
  %v1607 = vpack.c.b16 %v1522, %v1521
  %v1608 = vpack.c.b16 %v1524, %v1523
  %v1609 = vpack.c.b16 %v1526, %v1525
  %v1610 = vpack.c.b16 %v1528, %v1527
  %v1611 = vpack.c.b16 %v1530, %v1529
  %v1612 = vpack.c.b16 %v1532, %v1531
  %v1613 = vpack.c.b16 %v1534, %v1533
  %v1614 = vpack.c.b16 %v1536, %v1535
  %v1615 = vpack.c.b16 %v1538, %v1537
  %v1616 = vpack.c.b16 %v1540, %v1539
  %v1617 = vpack.c.b16 %v1542, %v1541
  %v1618 = vpack.c.b16 %v1544, %v1543
  %v1619 = vpack.c.b16 %v1546, %v1545
  %v1620 = vpack.c.b16 %v1548, %v1547
  %1693 = vmatpush.bf16.msra.mxu0 %v1556
  %1694 = vmatpush.bf16.msra.mxu0 %v1555
  %1695 = vmatpush.bf16.msra.mxu0 %v1554
  %1696 = vmatpush.bf16.msra.mxu0 %v1553
  %1697 = vmatpush.bf16.msra.mxu0 %v1552
  %1698 = vmatpush.bf16.msra.mxu0 %v1551
  %1699 = vmatpush.bf16.msra.mxu0 %v1550
  %1700 = vmatpush.bf16.msra.mxu0 %v1549
  %1701 = vmatmul.bf16.gmra.mxu0 %v1117
  %v1702 = vpop.f32.mrf.mxu0
  %v1703 = vadd.f32 %v891, %v1702
  %v1704 = vpop.f32.mrf.mxu0
  %v1705 = vadd.f32 %v891, %v1704
  %1706 = vmatmul.bf16.gmra.mxu0 %v1126
  %v1707 = vpop.f32.mrf.mxu0
  %v1708 = vadd.f32 %v891, %v1707
  %v1709 = vpop.f32.mrf.mxu0
  %v1710 = vadd.f32 %v891, %v1709
  %1711 = vmatmul.bf16.gmra.mxu0 %v1135
  %v1712 = vpop.f32.mrf.mxu0
  %v1713 = vadd.f32 %v891, %v1712
  %v1714 = vpop.f32.mrf.mxu0
  %v1715 = vadd.f32 %v891, %v1714
  %1716 = vmatmul.bf16.gmra.mxu0 %v1144
  %v1717 = vpop.f32.mrf.mxu0
  %v1718 = vadd.f32 %v891, %v1717
  %v1719 = vpop.f32.mrf.mxu0
  %v1720 = vadd.f32 %v891, %v1719
  %1721 = vmatmul.bf16.gmra.mxu0 %v1153
  %v1722 = vpop.f32.mrf.mxu0
  %v1723 = vadd.f32 %v891, %v1722
  %v1724 = vpop.f32.mrf.mxu0
  %v1725 = vadd.f32 %v891, %v1724
  %1726 = vmatmul.bf16.gmra.mxu0 %v1162
  %v1727 = vpop.f32.mrf.mxu0
  %v1728 = vadd.f32 %v891, %v1727
  %v1729 = vpop.f32.mrf.mxu0
  %v1730 = vadd.f32 %v891, %v1729
  %1731 = vmatmul.bf16.gmra.mxu0 %v1171
  %v1732 = vpop.f32.mrf.mxu0
  %v1733 = vadd.f32 %v891, %v1732
  %v1734 = vpop.f32.mrf.mxu0
  %v1735 = vadd.f32 %v891, %v1734
  %1736 = vmatmul.bf16.gmra.mxu0 %v1180
  %v1737 = vpop.f32.mrf.mxu0
  %v1738 = vadd.f32 %v891, %v1737
  %v1739 = vpop.f32.mrf.mxu0
  %v1740 = vadd.f32 %v891, %v1739
  %1741 = vdwg.mxu0
  %1742 = vmatpush.bf16.msra.mxu0 %v1564
  %1743 = vmatpush.bf16.msra.mxu0 %v1563
  %1744 = vmatpush.bf16.msra.mxu0 %v1562
  %1745 = vmatpush.bf16.msra.mxu0 %v1561
  %1746 = vmatpush.bf16.msra.mxu0 %v1560
  %1747 = vmatpush.bf16.msra.mxu0 %v1559
  %1748 = vmatpush.bf16.msra.mxu0 %v1558
  %1749 = vmatpush.bf16.msra.mxu0 %v1557
  %1750 = vmatmul.bf16.gmra.mxu0 %v1118
  %v1751 = vpop.f32.mrf.mxu0
  %v1752 = vadd.f32 %v1703, %v1751
  %v1753 = vpop.f32.mrf.mxu0
  %v1754 = vadd.f32 %v1705, %v1753
  %1755 = vmatmul.bf16.gmra.mxu0 %v1127
  %v1756 = vpop.f32.mrf.mxu0
  %v1757 = vadd.f32 %v1708, %v1756
  %v1758 = vpop.f32.mrf.mxu0
  %v1759 = vadd.f32 %v1710, %v1758
  %1760 = vmatmul.bf16.gmra.mxu0 %v1136
  %v1761 = vpop.f32.mrf.mxu0
  %v1762 = vadd.f32 %v1713, %v1761
  %v1763 = vpop.f32.mrf.mxu0
  %v1764 = vadd.f32 %v1715, %v1763
  %1765 = vmatmul.bf16.gmra.mxu0 %v1145
  %v1766 = vpop.f32.mrf.mxu0
  %v1767 = vadd.f32 %v1718, %v1766
  %v1768 = vpop.f32.mrf.mxu0
  %v1769 = vadd.f32 %v1720, %v1768
  %1770 = vmatmul.bf16.gmra.mxu0 %v1154
  %v1771 = vpop.f32.mrf.mxu0
  %v1772 = vadd.f32 %v1723, %v1771
  %v1773 = vpop.f32.mrf.mxu0
  %v1774 = vadd.f32 %v1725, %v1773
  %1775 = vmatmul.bf16.gmra.mxu0 %v1163
  %v1776 = vpop.f32.mrf.mxu0
  %v1777 = vadd.f32 %v1728, %v1776
  %v1778 = vpop.f32.mrf.mxu0
  %v1779 = vadd.f32 %v1730, %v1778
  %1780 = vmatmul.bf16.gmra.mxu0 %v1172
  %v1781 = vpop.f32.mrf.mxu0
  %v1782 = vadd.f32 %v1733, %v1781
  %v1783 = vpop.f32.mrf.mxu0
  %v1784 = vadd.f32 %v1735, %v1783
  %1785 = vmatmul.bf16.gmra.mxu0 %v1181
  %v1786 = vpop.f32.mrf.mxu0
  %v1787 = vadd.f32 %v1738, %v1786
  %v1788 = vpop.f32.mrf.mxu0
  %v1789 = vadd.f32 %v1740, %v1788
  %1790 = vdwg.mxu0
  %1791 = vmatpush.bf16.msra.mxu0 %v1572
  %1792 = vmatpush.bf16.msra.mxu0 %v1571
  %1793 = vmatpush.bf16.msra.mxu0 %v1570
  %1794 = vmatpush.bf16.msra.mxu0 %v1569
  %1795 = vmatpush.bf16.msra.mxu0 %v1568
  %1796 = vmatpush.bf16.msra.mxu0 %v1567
  %1797 = vmatpush.bf16.msra.mxu0 %v1566
  %1798 = vmatpush.bf16.msra.mxu0 %v1565
  %1799 = vmatmul.bf16.gmra.mxu0 %v1119
  %v1800 = vpop.f32.mrf.mxu0
  %v1801 = vadd.f32 %v1752, %v1800
  %v1802 = vpop.f32.mrf.mxu0
  %v1803 = vadd.f32 %v1754, %v1802
  %1804 = vmatmul.bf16.gmra.mxu0 %v1128
  %v1805 = vpop.f32.mrf.mxu0
  %v1806 = vadd.f32 %v1757, %v1805
  %v1807 = vpop.f32.mrf.mxu0
  %v1808 = vadd.f32 %v1759, %v1807
  %1809 = vmatmul.bf16.gmra.mxu0 %v1137
  %v1810 = vpop.f32.mrf.mxu0
  %v1811 = vadd.f32 %v1762, %v1810
  %v1812 = vpop.f32.mrf.mxu0
  %v1813 = vadd.f32 %v1764, %v1812
  %1814 = vmatmul.bf16.gmra.mxu0 %v1146
  %v1815 = vpop.f32.mrf.mxu0
  %v1816 = vadd.f32 %v1767, %v1815
  %v1817 = vpop.f32.mrf.mxu0
  %v1818 = vadd.f32 %v1769, %v1817
  %1819 = vmatmul.bf16.gmra.mxu0 %v1155
  %v1820 = vpop.f32.mrf.mxu0
  %v1821 = vadd.f32 %v1772, %v1820
  %v1822 = vpop.f32.mrf.mxu0
  %v1823 = vadd.f32 %v1774, %v1822
  %1824 = vmatmul.bf16.gmra.mxu0 %v1164
  %v1825 = vpop.f32.mrf.mxu0
  %v1826 = vadd.f32 %v1777, %v1825
  %v1827 = vpop.f32.mrf.mxu0
  %v1828 = vadd.f32 %v1779, %v1827
  %1829 = vmatmul.bf16.gmra.mxu0 %v1173
  %v1830 = vpop.f32.mrf.mxu0
  %v1831 = vadd.f32 %v1782, %v1830
  %v1832 = vpop.f32.mrf.mxu0
  %v1833 = vadd.f32 %v1784, %v1832
  %1834 = vmatmul.bf16.gmra.mxu0 %v1182
  %v1835 = vpop.f32.mrf.mxu0
  %v1836 = vadd.f32 %v1787, %v1835
  %v1837 = vpop.f32.mrf.mxu0
  %v1838 = vadd.f32 %v1789, %v1837
  %1839 = vdwg.mxu0
  %1840 = vmatpush.bf16.msra.mxu0 %v1580
  %1841 = vmatpush.bf16.msra.mxu0 %v1579
  %1842 = vmatpush.bf16.msra.mxu0 %v1578
  %1843 = vmatpush.bf16.msra.mxu0 %v1577
  %1844 = vmatpush.bf16.msra.mxu0 %v1576
  %1845 = vmatpush.bf16.msra.mxu0 %v1575
  %1846 = vmatpush.bf16.msra.mxu0 %v1574
  %1847 = vmatpush.bf16.msra.mxu0 %v1573
  %1848 = vmatmul.bf16.gmra.mxu0 %v1120
  %v1849 = vpop.f32.mrf.mxu0
  %v1850 = vadd.f32 %v1801, %v1849
  %v1851 = vpop.f32.mrf.mxu0
  %v1852 = vadd.f32 %v1803, %v1851
  %1853 = vmatmul.bf16.gmra.mxu0 %v1129
  %v1854 = vpop.f32.mrf.mxu0
  %v1855 = vadd.f32 %v1806, %v1854
  %v1856 = vpop.f32.mrf.mxu0
  %v1857 = vadd.f32 %v1808, %v1856
  %1858 = vmatmul.bf16.gmra.mxu0 %v1138
  %v1859 = vpop.f32.mrf.mxu0
  %v1860 = vadd.f32 %v1811, %v1859
  %v1861 = vpop.f32.mrf.mxu0
  %v1862 = vadd.f32 %v1813, %v1861
  %1863 = vmatmul.bf16.gmra.mxu0 %v1147
  %v1864 = vpop.f32.mrf.mxu0
  %v1865 = vadd.f32 %v1816, %v1864
  %v1866 = vpop.f32.mrf.mxu0
  %v1867 = vadd.f32 %v1818, %v1866
  %1868 = vmatmul.bf16.gmra.mxu0 %v1156
  %v1869 = vpop.f32.mrf.mxu0
  %v1870 = vadd.f32 %v1821, %v1869
  %v1871 = vpop.f32.mrf.mxu0
  %v1872 = vadd.f32 %v1823, %v1871
  %1873 = vmatmul.bf16.gmra.mxu0 %v1165
  %v1874 = vpop.f32.mrf.mxu0
  %v1875 = vadd.f32 %v1826, %v1874
  %v1876 = vpop.f32.mrf.mxu0
  %v1877 = vadd.f32 %v1828, %v1876
  %1878 = vmatmul.bf16.gmra.mxu0 %v1174
  %v1879 = vpop.f32.mrf.mxu0
  %v1880 = vadd.f32 %v1831, %v1879
  %v1881 = vpop.f32.mrf.mxu0
  %v1882 = vadd.f32 %v1833, %v1881
  %1883 = vmatmul.bf16.gmra.mxu0 %v1183
  %v1884 = vpop.f32.mrf.mxu0
  %v1885 = vadd.f32 %v1836, %v1884
  %v1886 = vpop.f32.mrf.mxu0
  %v1887 = vadd.f32 %v1838, %v1886
  %1888 = vdwg.mxu0
  %1889 = vmatpush.bf16.msra.mxu0 %v1588
  %1890 = vmatpush.bf16.msra.mxu0 %v1587
  %1891 = vmatpush.bf16.msra.mxu0 %v1586
  %1892 = vmatpush.bf16.msra.mxu0 %v1585
  %1893 = vmatpush.bf16.msra.mxu0 %v1584
  %1894 = vmatpush.bf16.msra.mxu0 %v1583
  %1895 = vmatpush.bf16.msra.mxu0 %v1582
  %1896 = vmatpush.bf16.msra.mxu0 %v1581
  %1897 = vmatmul.bf16.gmra.mxu0 %v1121
  %v1898 = vpop.f32.mrf.mxu0
  %v1899 = vadd.f32 %v1850, %v1898
  %v1900 = vpop.f32.mrf.mxu0
  %v1901 = vadd.f32 %v1852, %v1900
  %1902 = vmatmul.bf16.gmra.mxu0 %v1130
  %v1903 = vpop.f32.mrf.mxu0
  %v1904 = vadd.f32 %v1855, %v1903
  %v1905 = vpop.f32.mrf.mxu0
  %v1906 = vadd.f32 %v1857, %v1905
  %1907 = vmatmul.bf16.gmra.mxu0 %v1139
  %v1908 = vpop.f32.mrf.mxu0
  %v1909 = vadd.f32 %v1860, %v1908
  %v1910 = vpop.f32.mrf.mxu0
  %v1911 = vadd.f32 %v1862, %v1910
  %1912 = vmatmul.bf16.gmra.mxu0 %v1148
  %v1913 = vpop.f32.mrf.mxu0
  %v1914 = vadd.f32 %v1865, %v1913
  %v1915 = vpop.f32.mrf.mxu0
  %v1916 = vadd.f32 %v1867, %v1915
  %1917 = vmatmul.bf16.gmra.mxu0 %v1157
  %v1918 = vpop.f32.mrf.mxu0
  %v1919 = vadd.f32 %v1870, %v1918
  %v1920 = vpop.f32.mrf.mxu0
  %v1921 = vadd.f32 %v1872, %v1920
  %1922 = vmatmul.bf16.gmra.mxu0 %v1166
  %v1923 = vpop.f32.mrf.mxu0
  %v1924 = vadd.f32 %v1875, %v1923
  %v1925 = vpop.f32.mrf.mxu0
  %v1926 = vadd.f32 %v1877, %v1925
  %1927 = vmatmul.bf16.gmra.mxu0 %v1175
  %v1928 = vpop.f32.mrf.mxu0
  %v1929 = vadd.f32 %v1880, %v1928
  %v1930 = vpop.f32.mrf.mxu0
  %v1931 = vadd.f32 %v1882, %v1930
  %1932 = vmatmul.bf16.gmra.mxu0 %v1184
  %v1933 = vpop.f32.mrf.mxu0
  %v1934 = vadd.f32 %v1885, %v1933
  %v1935 = vpop.f32.mrf.mxu0
  %v1936 = vadd.f32 %v1887, %v1935
  %1937 = vdwg.mxu0
  %1938 = vmatpush.bf16.msra.mxu0 %v1596
  %1939 = vmatpush.bf16.msra.mxu0 %v1595
  %1940 = vmatpush.bf16.msra.mxu0 %v1594
  %1941 = vmatpush.bf16.msra.mxu0 %v1593
  %1942 = vmatpush.bf16.msra.mxu0 %v1592
  %1943 = vmatpush.bf16.msra.mxu0 %v1591
  %1944 = vmatpush.bf16.msra.mxu0 %v1590
  %1945 = vmatpush.bf16.msra.mxu0 %v1589
  %1946 = vmatmul.bf16.gmra.mxu0 %v1122
  %v1947 = vpop.f32.mrf.mxu0
  %v1948 = vadd.f32 %v1899, %v1947
  %v1949 = vpop.f32.mrf.mxu0
  %v1950 = vadd.f32 %v1901, %v1949
  %1951 = vmatmul.bf16.gmra.mxu0 %v1131
  %v1952 = vpop.f32.mrf.mxu0
  %v1953 = vadd.f32 %v1904, %v1952
  %v1954 = vpop.f32.mrf.mxu0
  %v1955 = vadd.f32 %v1906, %v1954
  %1956 = vmatmul.bf16.gmra.mxu0 %v1140
  %v1957 = vpop.f32.mrf.mxu0
  %v1958 = vadd.f32 %v1909, %v1957
  %v1959 = vpop.f32.mrf.mxu0
  %v1960 = vadd.f32 %v1911, %v1959
  %1961 = vmatmul.bf16.gmra.mxu0 %v1149
  %v1962 = vpop.f32.mrf.mxu0
  %v1963 = vadd.f32 %v1914, %v1962
  %v1964 = vpop.f32.mrf.mxu0
  %v1965 = vadd.f32 %v1916, %v1964
  %1966 = vmatmul.bf16.gmra.mxu0 %v1158
  %v1967 = vpop.f32.mrf.mxu0
  %v1968 = vadd.f32 %v1919, %v1967
  %v1969 = vpop.f32.mrf.mxu0
  %v1970 = vadd.f32 %v1921, %v1969
  %1971 = vmatmul.bf16.gmra.mxu0 %v1167
  %v1972 = vpop.f32.mrf.mxu0
  %v1973 = vadd.f32 %v1924, %v1972
  %v1974 = vpop.f32.mrf.mxu0
  %v1975 = vadd.f32 %v1926, %v1974
  %1976 = vmatmul.bf16.gmra.mxu0 %v1176
  %v1977 = vpop.f32.mrf.mxu0
  %v1978 = vadd.f32 %v1929, %v1977
  %v1979 = vpop.f32.mrf.mxu0
  %v1980 = vadd.f32 %v1931, %v1979
  %1981 = vmatmul.bf16.gmra.mxu0 %v1185
  %v1982 = vpop.f32.mrf.mxu0
  %v1983 = vadd.f32 %v1934, %v1982
  %v1984 = vpop.f32.mrf.mxu0
  %v1985 = vadd.f32 %v1936, %v1984
  %1986 = vdwg.mxu0
  %1987 = vmatpush.bf16.msra.mxu0 %v1604
  %1988 = vmatpush.bf16.msra.mxu0 %v1603
  %1989 = vmatpush.bf16.msra.mxu0 %v1602
  %1990 = vmatpush.bf16.msra.mxu0 %v1601
  %1991 = vmatpush.bf16.msra.mxu0 %v1600
  %1992 = vmatpush.bf16.msra.mxu0 %v1599
  %1993 = vmatpush.bf16.msra.mxu0 %v1598
  %1994 = vmatpush.bf16.msra.mxu0 %v1597
  %1995 = vmatmul.bf16.gmra.mxu0 %v1123
  %v1996 = vpop.f32.mrf.mxu0
  %v1997 = vadd.f32 %v1948, %v1996
  %v1998 = vpop.f32.mrf.mxu0
  %v1999 = vadd.f32 %v1950, %v1998
  %2000 = vmatmul.bf16.gmra.mxu0 %v1132
  %v2001 = vpop.f32.mrf.mxu0
  %v2002 = vadd.f32 %v1953, %v2001
  %v2003 = vpop.f32.mrf.mxu0
  %v2004 = vadd.f32 %v1955, %v2003
  %2005 = vmatmul.bf16.gmra.mxu0 %v1141
  %v2006 = vpop.f32.mrf.mxu0
  %v2007 = vadd.f32 %v1958, %v2006
  %v2008 = vpop.f32.mrf.mxu0
  %v2009 = vadd.f32 %v1960, %v2008
  %2010 = vmatmul.bf16.gmra.mxu0 %v1150
  %v2011 = vpop.f32.mrf.mxu0
  %v2012 = vadd.f32 %v1963, %v2011
  %v2013 = vpop.f32.mrf.mxu0
  %v2014 = vadd.f32 %v1965, %v2013
  %2015 = vmatmul.bf16.gmra.mxu0 %v1159
  %v2016 = vpop.f32.mrf.mxu0
  %v2017 = vadd.f32 %v1968, %v2016
  %v2018 = vpop.f32.mrf.mxu0
  %v2019 = vadd.f32 %v1970, %v2018
  %2020 = vmatmul.bf16.gmra.mxu0 %v1168
  %v2021 = vpop.f32.mrf.mxu0
  %v2022 = vadd.f32 %v1973, %v2021
  %v2023 = vpop.f32.mrf.mxu0
  %v2024 = vadd.f32 %v1975, %v2023
  %2025 = vmatmul.bf16.gmra.mxu0 %v1177
  %v2026 = vpop.f32.mrf.mxu0
  %v2027 = vadd.f32 %v1978, %v2026
  %v2028 = vpop.f32.mrf.mxu0
  %v2029 = vadd.f32 %v1980, %v2028
  %2030 = vmatmul.bf16.gmra.mxu0 %v1186
  %v2031 = vpop.f32.mrf.mxu0
  %v2032 = vadd.f32 %v1983, %v2031
  %v2033 = vpop.f32.mrf.mxu0
  %v2034 = vadd.f32 %v1985, %v2033
  %2035 = vdwg.mxu0
  %2036 = vmatpush.bf16.msra.mxu0 %v1612
  %2037 = vmatpush.bf16.msra.mxu0 %v1611
  %2038 = vmatpush.bf16.msra.mxu0 %v1610
  %2039 = vmatpush.bf16.msra.mxu0 %v1609
  %2040 = vmatpush.bf16.msra.mxu0 %v1608
  %2041 = vmatpush.bf16.msra.mxu0 %v1607
  %2042 = vmatpush.bf16.msra.mxu0 %v1606
  %2043 = vmatpush.bf16.msra.mxu0 %v1605
  %2044 = vmatmul.bf16.gmra.mxu0 %v1124
  %v2045 = vpop.f32.mrf.mxu0
  %v2046 = vadd.f32 %v1997, %v2045
  %v2047 = vpop.f32.mrf.mxu0
  %v2048 = vadd.f32 %v1999, %v2047
  %2049 = vmatmul.bf16.gmra.mxu0 %v1133
  %v2050 = vpop.f32.mrf.mxu0
  %v2051 = vadd.f32 %v2002, %v2050
  %v2052 = vpop.f32.mrf.mxu0
  %v2053 = vadd.f32 %v2004, %v2052
  %2054 = vmatmul.bf16.gmra.mxu0 %v1142
  %v2055 = vpop.f32.mrf.mxu0
  %v2056 = vadd.f32 %v2007, %v2055
  %v2057 = vpop.f32.mrf.mxu0
  %v2058 = vadd.f32 %v2009, %v2057
  %2059 = vmatmul.bf16.gmra.mxu0 %v1151
  %v2060 = vpop.f32.mrf.mxu0
  %v2061 = vadd.f32 %v2012, %v2060
  %v2062 = vpop.f32.mrf.mxu0
  %v2063 = vadd.f32 %v2014, %v2062
  %2064 = vmatmul.bf16.gmra.mxu0 %v1160
  %v2065 = vpop.f32.mrf.mxu0
  %v2066 = vadd.f32 %v2017, %v2065
  %v2067 = vpop.f32.mrf.mxu0
  %v2068 = vadd.f32 %v2019, %v2067
  %2069 = vmatmul.bf16.gmra.mxu0 %v1169
  %v2070 = vpop.f32.mrf.mxu0
  %v2071 = vadd.f32 %v2022, %v2070
  %v2072 = vpop.f32.mrf.mxu0
  %v2073 = vadd.f32 %v2024, %v2072
  %2074 = vmatmul.bf16.gmra.mxu0 %v1178
  %v2075 = vpop.f32.mrf.mxu0
  %v2076 = vadd.f32 %v2027, %v2075
  %v2077 = vpop.f32.mrf.mxu0
  %v2078 = vadd.f32 %v2029, %v2077
  %2079 = vmatmul.bf16.gmra.mxu0 %v1187
  %v2080 = vpop.f32.mrf.mxu0
  %v2081 = vadd.f32 %v2032, %v2080
  %v2082 = vpop.f32.mrf.mxu0
  %v2083 = vadd.f32 %v2034, %v2082
  %2084 = vdwg.mxu0
  %2085 = vmatpush.bf16.msra.mxu0 %v1620
  %2086 = vmatpush.bf16.msra.mxu0 %v1619
  %2087 = vmatpush.bf16.msra.mxu0 %v1618
  %2088 = vmatpush.bf16.msra.mxu0 %v1617
  %2089 = vmatpush.bf16.msra.mxu0 %v1616
  %2090 = vmatpush.bf16.msra.mxu0 %v1615
  %2091 = vmatpush.bf16.msra.mxu0 %v1614
  %2092 = vmatpush.bf16.msra.mxu0 %v1613
  %2093 = vmatmul.bf16.gmra.mxu0 %v1125
  %v2094 = vpop.f32.mrf.mxu0
  %v2095 = vadd.f32 %v2046, %v2094
  %v2096 = vpop.f32.mrf.mxu0
  %v2097 = vadd.f32 %v2048, %v2096
  %2098 = vmatmul.bf16.gmra.mxu0 %v1134
  %v2099 = vpop.f32.mrf.mxu0
  %v2100 = vadd.f32 %v2051, %v2099
  %v2101 = vpop.f32.mrf.mxu0
  %v2102 = vadd.f32 %v2053, %v2101
  %2103 = vmatmul.bf16.gmra.mxu0 %v1143
  %v2104 = vpop.f32.mrf.mxu0
  %v2105 = vadd.f32 %v2056, %v2104
  %v2106 = vpop.f32.mrf.mxu0
  %v2107 = vadd.f32 %v2058, %v2106
  %2108 = vmatmul.bf16.gmra.mxu0 %v1152
  %v2109 = vpop.f32.mrf.mxu0
  %v2110 = vadd.f32 %v2061, %v2109
  %v2111 = vpop.f32.mrf.mxu0
  %v2112 = vadd.f32 %v2063, %v2111
  %2113 = vmatmul.bf16.gmra.mxu0 %v1161
  %v2114 = vpop.f32.mrf.mxu0
  %v2115 = vadd.f32 %v2066, %v2114
  %v2116 = vpop.f32.mrf.mxu0
  %v2117 = vadd.f32 %v2068, %v2116
  %2118 = vmatmul.bf16.gmra.mxu0 %v1170
  %v2119 = vpop.f32.mrf.mxu0
  %v2120 = vadd.f32 %v2071, %v2119
  %v2121 = vpop.f32.mrf.mxu0
  %v2122 = vadd.f32 %v2073, %v2121
  %2123 = vmatmul.bf16.gmra.mxu0 %v1179
  %v2124 = vpop.f32.mrf.mxu0
  %v2125 = vadd.f32 %v2076, %v2124
  %v2126 = vpop.f32.mrf.mxu0
  %v2127 = vadd.f32 %v2078, %v2126
  %2128 = vmatmul.bf16.gmra.mxu0 %v1188
  %v2129 = vpop.f32.mrf.mxu0
  %v2130 = vadd.f32 %v2081, %v2129
  %v2131 = vpop.f32.mrf.mxu0
  %v2132 = vadd.f32 %v2083, %v2131
  %2133 = vdwg.mxu0
  %vm2134 = vcmp.gt.f32.partialorder %v2095, 0.0
  %vm2135 = vcmp.gt.f32.partialorder %v2097, 0.0
  %vm2136 = vcmp.gt.f32.partialorder %v2100, 0.0
  %vm2137 = vcmp.gt.f32.partialorder %v2102, 0.0
  %vm2138 = vcmp.gt.f32.partialorder %v2105, 0.0
  %vm2139 = vcmp.gt.f32.partialorder %v2107, 0.0
  %vm2140 = vcmp.gt.f32.partialorder %v2110, 0.0
  %vm2141 = vcmp.gt.f32.partialorder %v2112, 0.0
  %vm2142 = vcmp.gt.f32.partialorder %v2115, 0.0
  %vm2143 = vcmp.gt.f32.partialorder %v2117, 0.0
  %vm2144 = vcmp.gt.f32.partialorder %v2120, 0.0
  %vm2145 = vcmp.gt.f32.partialorder %v2122, 0.0
  %vm2146 = vcmp.gt.f32.partialorder %v2125, 0.0
  %vm2147 = vcmp.gt.f32.partialorder %v2127, 0.0
  %vm2148 = vcmp.gt.f32.partialorder %v2130, 0.0
  %vm2149 = vcmp.gt.f32.partialorder %v2132, 0.0
  %v2150 = vmul.f32 %v2095, 0.01
  %v2151 = vmul.f32 %v2097, 0.01
  %v2152 = vmul.f32 %v2100, 0.01
  %v2153 = vmul.f32 %v2102, 0.01
  %v2154 = vmul.f32 %v2105, 0.01
  %v2155 = vmul.f32 %v2107, 0.01
  %v2156 = vmul.f32 %v2110, 0.01
  %v2157 = vmul.f32 %v2112, 0.01
  %v2158 = vmul.f32 %v2115, 0.01
  %v2159 = vmul.f32 %v2117, 0.01
  %v2160 = vmul.f32 %v2120, 0.01
  %v2161 = vmul.f32 %v2122, 0.01
  %v2162 = vmul.f32 %v2125, 0.01
  %v2163 = vmul.f32 %v2127, 0.01
  %v2164 = vmul.f32 %v2130, 0.01
  %v2165 = vmul.f32 %v2132, 0.01
  %v2166 = vsel %vm2134, %v2095, %v2150
  %v2167 = vsel %vm2135, %v2097, %v2151
  %v2168 = vsel %vm2136, %v2100, %v2152
  %v2169 = vsel %vm2137, %v2102, %v2153
  %v2170 = vsel %vm2138, %v2105, %v2154
  %v2171 = vsel %vm2139, %v2107, %v2155
  %v2172 = vsel %vm2140, %v2110, %v2156
  %v2173 = vsel %vm2141, %v2112, %v2157
  %v2174 = vsel %vm2142, %v2115, %v2158
  %v2175 = vsel %vm2143, %v2117, %v2159
  %v2176 = vsel %vm2144, %v2120, %v2160
  %v2177 = vsel %vm2145, %v2122, %v2161
  %v2178 = vsel %vm2146, %v2125, %v2162
  %v2179 = vsel %vm2147, %v2127, %v2163
  %v2180 = vsel %vm2148, %v2130, %v2164
  %v2181 = vsel %vm2149, %v2132, %v2165
  %v2182 = vpack.c.bf16 %v2167, %v2166
  %v2183 = vpack.c.bf16 %v2169, %v2168
  %v2184 = vpack.c.bf16 %v2171, %v2170
  %v2185 = vpack.c.bf16 %v2173, %v2172
  %v2186 = vpack.c.bf16 %v2175, %v2174
  %v2187 = vpack.c.bf16 %v2177, %v2176
  %v2188 = vpack.c.bf16 %v2179, %v2178
  %v2189 = vpack.c.bf16 %v2181, %v2180
  %v2190 = vld [vmem:[%s5] sm:$0xf]
  %v2191 = vld [vmem:[%s5 + $0x4] sm:$0xf]
  %v2192 = vld [vmem:[%s5 + $0x8] sm:$0xf]
  %v2193 = vld [vmem:[%s5 + $0xc] sm:$0xf]
  %v2194 = vld [vmem:[%s5 + $0x10] sm:$0xf]
  %v2195 = vld [vmem:[%s5 + $0x14] sm:$0xf]
  %v2196 = vld [vmem:[%s5 + $0x18] sm:$0xf]
  %v2197 = vld [vmem:[%s5 + $0x1c] sm:$0xf]
  %v2198 = vld [vmem:[%s5 + $0x20] sm:$0xf]
  %v2199 = vld [vmem:[%s5 + $0x24] sm:$0xf]
  %v2200 = vld [vmem:[%s5 + $0x28] sm:$0xf]
  %v2201 = vld [vmem:[%s5 + $0x2c] sm:$0xf]
  %v2202 = vld [vmem:[%s5 + $0x30] sm:$0xf]
  %v2203 = vld [vmem:[%s5 + $0x34] sm:$0xf]
  %v2204 = vld [vmem:[%s5 + $0x38] sm:$0xf]
  %v2205 = vld [vmem:[%s5 + $0x3c] sm:$0xf]
  %v2206 = vld [vmem:[%s6] sm:$0x1]
  %v2208 = vperm.slane %v2206, 0
  %v2226 = vunpack.c.l.b16 %v2190
  %v2227 = vunpack.c.l.b16 %v2191
  %v2228 = vunpack.c.l.b16 %v2192
  %v2229 = vunpack.c.l.b16 %v2193
  %v2230 = vunpack.c.l.b16 %v2194
  %v2231 = vunpack.c.l.b16 %v2195
  %v2232 = vunpack.c.l.b16 %v2196
  %v2233 = vunpack.c.l.b16 %v2197
  %v2234 = vunpack.c.l.b16 %v2198
  %v2235 = vunpack.c.l.b16 %v2199
  %v2236 = vunpack.c.l.b16 %v2200
  %v2237 = vunpack.c.l.b16 %v2201
  %v2238 = vunpack.c.l.b16 %v2202
  %v2239 = vunpack.c.l.b16 %v2203
  %v2240 = vunpack.c.l.b16 %v2204
  %v2241 = vunpack.c.l.b16 %v2205
  %v2242 = vpack.c.b16 %v2227, %v2226
  %v2243 = vpack.c.b16 %v2229, %v2228
  %v2244 = vpack.c.b16 %v2231, %v2230
  %v2245 = vpack.c.b16 %v2233, %v2232
  %v2246 = vpack.c.b16 %v2235, %v2234
  %v2247 = vpack.c.b16 %v2237, %v2236
  %v2248 = vpack.c.b16 %v2239, %v2238
  %v2249 = vpack.c.b16 %v2241, %v2240
  %2258 = vmatpush.bf16.msra.mxu0 %v2249
  %2259 = vmatpush.bf16.msra.mxu0 %v2248
  %2260 = vmatpush.bf16.msra.mxu0 %v2247
  %2261 = vmatpush.bf16.msra.mxu0 %v2246
  %2262 = vmatpush.bf16.msra.mxu0 %v2245
  %2263 = vmatpush.bf16.msra.mxu0 %v2244
  %2264 = vmatpush.bf16.msra.mxu0 %v2243
  %2265 = vmatpush.bf16.msra.mxu0 %v2242
  %2266 = vmatmul.bf16.gmra.mxu0 %v2182
  %v2267 = vpop.f32.mrf.mxu0
  %v2268 = vadd.f32 %v2208, %v2267
  %v2269 = vpop.f32.mrf.mxu0
  %v2270 = vadd.f32 %v2208, %v2269
  %2271 = vmatmul.bf16.gmra.mxu0 %v2183
  %v2272 = vpop.f32.mrf.mxu0
  %v2273 = vadd.f32 %v2208, %v2272
  %v2274 = vpop.f32.mrf.mxu0
  %v2275 = vadd.f32 %v2208, %v2274
  %2276 = vmatmul.bf16.gmra.mxu0 %v2184
  %v2277 = vpop.f32.mrf.mxu0
  %v2278 = vadd.f32 %v2208, %v2277
  %v2279 = vpop.f32.mrf.mxu0
  %v2280 = vadd.f32 %v2208, %v2279
  %2281 = vmatmul.bf16.gmra.mxu0 %v2185
  %v2282 = vpop.f32.mrf.mxu0
  %v2283 = vadd.f32 %v2208, %v2282
  %v2284 = vpop.f32.mrf.mxu0
  %v2285 = vadd.f32 %v2208, %v2284
  %2286 = vmatmul.bf16.gmra.mxu0 %v2186
  %v2287 = vpop.f32.mrf.mxu0
  %v2288 = vadd.f32 %v2208, %v2287
  %v2289 = vpop.f32.mrf.mxu0
  %v2290 = vadd.f32 %v2208, %v2289
  %2291 = vmatmul.bf16.gmra.mxu0 %v2187
  %v2292 = vpop.f32.mrf.mxu0
  %v2293 = vadd.f32 %v2208, %v2292
  %v2294 = vpop.f32.mrf.mxu0
  %v2295 = vadd.f32 %v2208, %v2294
  %2296 = vmatmul.bf16.gmra.mxu0 %v2188
  %v2297 = vpop.f32.mrf.mxu0
  %v2298 = vadd.f32 %v2208, %v2297
  %v2299 = vpop.f32.mrf.mxu0
  %v2300 = vadd.f32 %v2208, %v2299
  %2301 = vmatmul.bf16.gmra.mxu0 %v2189
  %v2302 = vpop.f32.mrf.mxu0
  %v2303 = vadd.f32 %v2208, %v2302
  %v2304 = vpop.f32.mrf.mxu0
  %v2305 = vadd.f32 %v2208, %v2304
  %2306 = vdwg.mxu0
  %2307 = vst [vmem:[%s7] sm:$0xff] %v2268
  %2308 = vst [vmem:[%s7 + $0x8] sm:$0xff] %v2270
  %2309 = vst [vmem:[%s7 + $0x10] sm:$0xff] %v2273
  %2310 = vst [vmem:[%s7 + $0x18] sm:$0xff] %v2275
  %2311 = vst [vmem:[%s7 + $0x20] sm:$0xff] %v2278
  %2312 = vst [vmem:[%s7 + $0x28] sm:$0xff] %v2280
  %2313 = vst [vmem:[%s7 + $0x30] sm:$0xff] %v2283
  %2314 = vst [vmem:[%s7 + $0x38] sm:$0xff] %v2285
  %2315 = vst [vmem:[%s7 + $0x40] sm:$0xff] %v2288
  %2316 = vst [vmem:[%s7 + $0x48] sm:$0xff] %v2290
  %2317 = vst [vmem:[%s7 + $0x50] sm:$0xff] %v2293
  %2318 = vst [vmem:[%s7 + $0x58] sm:$0xff] %v2295
  %2319 = vst [vmem:[%s7 + $0x60] sm:$0xff] %v2298
  %2320 = vst [vmem:[%s7 + $0x68] sm:$0xff] %v2300
  %2321 = vst [vmem:[%s7 + $0x70] sm:$0xff] %v2303
  %2322 = vst [vmem:[%s7 + $0x78] sm:$0xff] %v2305
  // Predicated region
  $region30: #{_lambda_.1} parent=0 // pred_check
    _
  $region31: #{_lambda_.1} parent=0 // pred_check_branch
    %2324 = sbr.rel (0) target = $region33
  $region32: #{_lambda_.1} parent=0 // pred_region
    _
  $region33: #{_lambda_.1} parent=0 // pred_fallthru
    _
  // Predicated region
  $region34: #{_lambda_.1} parent=0 // pred_check
    _
  $region35: #{_lambda_.1} parent=0 // pred_check_branch
    %2326 = sbr.rel (0) target = $region37
  $region36: #{_lambda_.1} parent=0 // pred_region
    _
  $region37: #{_lambda_.1} parent=0 // pred_fallthru
    _

</llo_original>
